<compile_context>
chip_gen: v7x
topology: tpu7x:2x2x1
jax: 0.10.0
libtpu: 0.0.40
codegen_flags: <defaults>
</compile_context>

<pallas_src>
import jax
import jax.numpy as jnp
from jax.experimental import pallas as pl
from jax.experimental.pallas import tpu as pltpu

IN_DIM = 28 * 28        # 784
IN_PAD = 896            # 7 * 128 — lane-aligned contraction dim for fc1
HID = 256
OUT_DIM = 10
OUT_PAD = 128           # lane-dense output block, sliced back in the wrapper
LN_EPS = 1e-5           # torch.nn.LayerNorm default


def _relu_layernorm(y, gamma, beta):
    """relu -> layernorm over the last axis, single-pass statistics (f32)."""
    y = jnp.maximum(y, 0.0)
    inv_n = jnp.float32(1.0 / HID)
    s1 = jnp.sum(y, axis=-1, keepdims=True)
    s2 = jnp.sum(y * y, axis=-1, keepdims=True)
    mean = s1 * inv_n
    var = s2 * inv_n - mean * mean
    return (y - mean) * jax.lax.rsqrt(var + LN_EPS) * gamma + beta


def mlp_kernel(x_ref,
               w1_ref, b1_ref, g1_ref, be1_ref,
               w2_ref, b2_ref, g2_ref, be2_ref,
               w3_ref, b3_ref, g3_ref, be3_ref,
               w4_ref, b4_ref,
               o_ref):
    # layer 1: fc1 -> relu -> ln1   (bf16 MXU inputs, f32 accumulate / LN)
    h = jnp.dot(x_ref[...], w1_ref[...],
                preferred_element_type=jnp.float32) + b1_ref[...]
    h = _relu_layernorm(h, g1_ref[...], be1_ref[...]).astype(jnp.bfloat16)

    # layer 2: fc2 -> relu -> ln2
    h = jnp.dot(h, w2_ref[...],
                preferred_element_type=jnp.float32) + b2_ref[...]
    h = _relu_layernorm(h, g2_ref[...], be2_ref[...]).astype(jnp.bfloat16)

    # layer 3: fc3 -> relu -> ln3
    h = jnp.dot(h, w3_ref[...],
                preferred_element_type=jnp.float32) + b3_ref[...]
    h = _relu_layernorm(h, g3_ref[...], be3_ref[...]).astype(jnp.bfloat16)

    # head: fc4 into a lane-dense, zero-padded (tb, 128) block
    o_ref[...] = (jnp.dot(h, w4_ref[...], preferred_element_type=jnp.float32)
                  + b4_ref[...]).astype(o_ref.dtype)


def _round_up(n, m):
    return ((n + m - 1) // m) * m


def _prepare_params(params):
    """Cast linear weights to bf16, pad fc1's K dim and fc4's N dim."""
    bf = jnp.bfloat16
    f32 = lambda a: a.astype(jnp.float32)
    w1 = jnp.pad(params["w1"], ((0, IN_PAD - IN_DIM), (0, 0))).astype(bf)
    w2 = params["w2"].astype(bf)
    w3 = params["w3"].astype(bf)
    w4 = jnp.pad(params["w4"], ((0, 0), (0, OUT_PAD - OUT_DIM))).astype(bf)
    b4 = jnp.pad(params["b4"], ((0, 0), (0, OUT_PAD - OUT_DIM)))
    return (w1, f32(params["b1"]), f32(params["g1"]), f32(params["be1"]),
            w2, f32(params["b2"]), f32(params["g2"]), f32(params["be2"]),
            w3, f32(params["b3"]), f32(params["g3"]), f32(params["be3"]),
            w4, f32(b4))


def mlp_forward(x, params, *, tb=256):
    """x: (B, 784) float32. params: torch-equivalent weights already laid out
    as (in, out) plus (1, F) biases / layernorm params."""
    B = x.shape[0]
    tb = min(tb, _round_up(B, 8))          # shrink the tile for tiny batches
    Bp = _round_up(B, tb)                  # pad batch to a tile multiple

    # pad batch rows with zeros and features 784 -> 896 (zero K contribution)
    x = jnp.pad(x, ((0, Bp - B), (0, IN_PAD - IN_DIM))).astype(jnp.bfloat16)

    flat = _prepare_params(params)
    full = lambda a: pl.BlockSpec(a.shape, lambda i: (0,) * a.ndim)

    out = pl.pallas_call(
        mlp_kernel,
        out_shape=jax.ShapeDtypeStruct((Bp, OUT_PAD), jnp.float32),
        grid=(Bp // tb,),
        in_specs=[pl.BlockSpec((tb, IN_PAD), lambda i: (i, 0))]   # x over batch
                 + [full(a) for a in flat],                       # resident weights
        out_specs=pl.BlockSpec((tb, OUT_PAD), lambda i: (i, 0)),
        compiler_params=pltpu.CompilerParams(
            dimension_semantics=("parallel",)),
    )(x, *flat)

    return out[:B, :OUT_DIM]


def init_params(key):
    """Deterministic synthetic init. Linear weights are (in, out) so the kernel
    computes x @ W + b (equivalent to torch's x @ W^T + b)."""
    ks = jax.random.split(key, 4)

    def linear(k, fin, fout):
        kw, kb = jax.random.split(k)
        scale = 1.0 / jnp.sqrt(fin)
        w = jax.random.uniform(kw, (fin, fout), jnp.float32, -scale, scale)
        b = jax.random.uniform(kb, (1, fout), jnp.float32, -scale, scale)
        return w, b

    w1, b1 = linear(ks[0], IN_DIM, HID)
    w2, b2 = linear(ks[1], HID, HID)
    w3, b3 = linear(ks[2], HID, HID)
    w4, b4 = linear(ks[3], HID, OUT_DIM)

    ones = lambda f: jnp.ones((1, f), jnp.float32)
    zeros = lambda f: jnp.zeros((1, f), jnp.float32)
    return {
        "w1": w1, "b1": b1, "g1": ones(HID), "be1": zeros(HID),
        "w2": w2, "b2": b2, "g2": ones(HID), "be2": zeros(HID),
        "w3": w3, "b3": b3, "g3": ones(HID), "be3": zeros(HID),
        "w4": w4, "b4": b4,
    }


def mlp_reference(x, p, *, matmul_dtype=jnp.bfloat16):
    """Pure-JAX reference. matmul_dtype=bf16 matches the kernel's MXU inputs;
    matmul_dtype=f32 is the exact torch-equivalent math."""
    def mm(a, w):
        return jnp.dot(a.astype(matmul_dtype), w.astype(matmul_dtype),
                       preferred_element_type=jnp.float32)

    def ln_relu(y, g, b):
        y = jnp.maximum(y, 0.0)
        m = jnp.mean(y, -1, keepdims=True)
        v = jnp.mean((y - m) ** 2, -1, keepdims=True)
        return (y - m) / jnp.sqrt(v + LN_EPS) * g + b

    h = ln_relu(mm(x, p["w1"]) + p["b1"], p["g1"], p["be1"])
    h = ln_relu(mm(h, p["w2"]) + p["b2"], p["g2"], p["be2"])
    h = ln_relu(mm(h, p["w3"]) + p["b3"], p["g3"], p["be3"])
    return mm(h, p["w4"]) + p["b4"]


if __name__ == "__main__":
    key = jax.random.PRNGKey(0)
    k_param, k_x = jax.random.split(key)
    params = init_params(k_param)

    # B=4 exercises the tiny-batch / batch-padding path; B=300 exercises the
    # 256-row tile plus a ragged (padded) last tile.
    for B in (4, 300):
        x = jax.random.normal(jax.random.fold_in(k_x, B), (B, IN_DIM),
                              jnp.float32)
        out = jax.block_until_ready(mlp_forward(x, params))
        assert out.shape == (B, OUT_DIM)

        # tight check against a reference using the same bf16-input matmuls
        ref_bf16 = mlp_reference(x, params, matmul_dtype=jnp.bfloat16)
        assert jnp.allclose(out, ref_bf16, atol=1e-2, rtol=1e-2), (
            f"B={B} bf16-ref max abs err {jnp.max(jnp.abs(out - ref_bf16))}")

        # loose sanity check against full-f32 math (bf16 quantization error)
        ref_f32 = mlp_reference(x, params, matmul_dtype=jnp.float32)
        assert jnp.allclose(out, ref_f32, atol=1e-1, rtol=1e-1), (
            f"B={B} f32-ref max abs err {jnp.max(jnp.abs(out - ref_f32))}")

    print("KERNEL_OK")
</pallas_src>

<mosaic_0001>
module attributes {stable_mosaic.version = 11 : i64} {
  func.func @mlp_kernel(%arg0: i32, %arg1: memref<8x896xbf16, #tpu.memory_space<vmem>>, %arg2: memref<896x256xbf16, #tpu.memory_space<vmem>>, %arg3: memref<1x256xf32, #tpu.memory_space<vmem>>, %arg4: memref<1x256xf32, #tpu.memory_space<vmem>>, %arg5: memref<1x256xf32, #tpu.memory_space<vmem>>, %arg6: memref<256x256xbf16, #tpu.memory_space<vmem>>, %arg7: memref<1x256xf32, #tpu.memory_space<vmem>>, %arg8: memref<1x256xf32, #tpu.memory_space<vmem>>, %arg9: memref<1x256xf32, #tpu.memory_space<vmem>>, %arg10: memref<256x256xbf16, #tpu.memory_space<vmem>>, %arg11: memref<1x256xf32, #tpu.memory_space<vmem>>, %arg12: memref<1x256xf32, #tpu.memory_space<vmem>>, %arg13: memref<1x256xf32, #tpu.memory_space<vmem>>, %arg14: memref<256x128xbf16, #tpu.memory_space<vmem>>, %arg15: memref<1x128xf32, #tpu.memory_space<vmem>>, %arg16: memref<8x128xf32, #tpu.memory_space<vmem>>) attributes {dimension_semantics = [#tpu.dimension_semantics<parallel>], iteration_bounds = array<i64: 1>, scalar_prefetch = 0 : i64, scratch_operands = 0 : i64, tpu.core_type = #tpu.core_type<tc>, window_params = [{transform_indices = @transform_0, window_bounds = array<i64: 8, 896>}, {pipeline_mode = #tpu.pipeline_mode<synchronous>, transform_indices = @transform_1, window_bounds = array<i64: 896, 256>}, {pipeline_mode = #tpu.pipeline_mode<synchronous>, transform_indices = @transform_2, window_bounds = array<i64: 1, 256>}, {pipeline_mode = #tpu.pipeline_mode<synchronous>, transform_indices = @transform_3, window_bounds = array<i64: 1, 256>}, {pipeline_mode = #tpu.pipeline_mode<synchronous>, transform_indices = @transform_4, window_bounds = array<i64: 1, 256>}, {pipeline_mode = #tpu.pipeline_mode<synchronous>, transform_indices = @transform_5, window_bounds = array<i64: 256, 256>}, {pipeline_mode = #tpu.pipeline_mode<synchronous>, transform_indices = @transform_6, window_bounds = array<i64: 1, 256>}, {pipeline_mode = #tpu.pipeline_mode<synchronous>, transform_indices = @transform_7, window_bounds = array<i64: 1, 256>}, {pipeline_mode = #tpu.pipeline_mode<synchronous>, transform_indices = @transform_8, window_bounds = array<i64: 1, 256>}, {pipeline_mode = #tpu.pipeline_mode<synchronous>, transform_indices = @transform_9, window_bounds = array<i64: 256, 256>}, {pipeline_mode = #tpu.pipeline_mode<synchronous>, transform_indices = @transform_10, window_bounds = array<i64: 1, 256>}, {pipeline_mode = #tpu.pipeline_mode<synchronous>, transform_indices = @transform_11, window_bounds = array<i64: 1, 256>}, {pipeline_mode = #tpu.pipeline_mode<synchronous>, transform_indices = @transform_12, window_bounds = array<i64: 1, 256>}, {pipeline_mode = #tpu.pipeline_mode<synchronous>, transform_indices = @transform_13, window_bounds = array<i64: 256, 128>}, {pipeline_mode = #tpu.pipeline_mode<synchronous>, transform_indices = @transform_14, window_bounds = array<i64: 1, 128>}, {transform_indices = @transform_15, window_bounds = array<i64: 8, 128>}]} {
    %c0 = arith.constant 0 : index
    %c0_0 = arith.constant 0 : index
    %0 = vector.load %arg1[%c0, %c0_0] : memref<8x896xbf16, #tpu.memory_space<vmem>>, vector<8x896xbf16>
    %c0_1 = arith.constant 0 : index
    %c0_2 = arith.constant 0 : index
    %1 = vector.load %arg2[%c0_1, %c0_2] : memref<896x256xbf16, #tpu.memory_space<vmem>>, vector<896x256xbf16>
    %cst = arith.constant dense<0.000000e+00> : vector<8x256xf32>
    %2 = tpu.matmul %0, %1, %cst {dimension_numbers = #tpu.dot_dimension_numbers<[1], [0], [0], [1], [0, 0, 1, 1], [], []>} : vector<8x896xbf16>, vector<896x256xbf16>, vector<8x256xf32> -> vector<8x256xf32>
    %c0_3 = arith.constant 0 : index
    %c0_4 = arith.constant 0 : index
    %3 = vector.load %arg3[%c0_3, %c0_4] : memref<1x256xf32, #tpu.memory_space<vmem>>, vector<1x256xf32>
    %4 = vector.broadcast %3 : vector<1x256xf32> to vector<8x256xf32>
    %5 = arith.addf %2, %4 : vector<8x256xf32>
    %c0_5 = arith.constant 0 : index
    %c0_6 = arith.constant 0 : index
    %6 = vector.load %arg4[%c0_5, %c0_6] : memref<1x256xf32, #tpu.memory_space<vmem>>, vector<1x256xf32>
    %c0_7 = arith.constant 0 : index
    %c0_8 = arith.constant 0 : index
    %7 = vector.load %arg5[%c0_7, %c0_8] : memref<1x256xf32, #tpu.memory_space<vmem>>, vector<1x256xf32>
    %cst_9 = arith.constant 0.000000e+00 : f32
    %8 = vector.broadcast %cst_9 : f32 to vector<8x256xf32>
    %9 = arith.maximumf %5, %8 : vector<8x256xf32>
    %cst_10 = arith.constant dense<0.000000e+00> : vector<8xf32>
    %10 = vector.multi_reduction <add>, %9, %cst_10 [1] : vector<8x256xf32> to vector<8xf32>
    %11 = vector.shape_cast %10 : vector<8xf32> to vector<8x1xf32>
    %12 = arith.mulf %9, %9 : vector<8x256xf32>
    %cst_11 = arith.constant dense<0.000000e+00> : vector<8xf32>
    %13 = vector.multi_reduction <add>, %12, %cst_11 [1] : vector<8x256xf32> to vector<8xf32>
    %14 = vector.shape_cast %13 : vector<8xf32> to vector<8x1xf32>
    %cst_12 = arith.constant 3.906250e-03 : f32
    %15 = vector.broadcast %cst_12 : f32 to vector<8x1xf32>
    %16 = arith.mulf %11, %15 : vector<8x1xf32>
    %cst_13 = arith.constant 3.906250e-03 : f32
    %17 = vector.broadcast %cst_13 : f32 to vector<8x1xf32>
    %18 = arith.mulf %14, %17 : vector<8x1xf32>
    %19 = arith.mulf %16, %16 : vector<8x1xf32>
    %20 = arith.subf %18, %19 : vector<8x1xf32>
    %21 = vector.broadcast %16 : vector<8x1xf32> to vector<8x256xf32>
    %22 = arith.subf %9, %21 : vector<8x256xf32>
    %cst_14 = arith.constant 9.99999974E-6 : f32
    %23 = vector.broadcast %cst_14 : f32 to vector<8x1xf32>
    %24 = arith.addf %20, %23 : vector<8x1xf32>
    %25 = math.rsqrt %24 : vector<8x1xf32>
    %26 = vector.broadcast %25 : vector<8x1xf32> to vector<8x256xf32>
    %27 = arith.mulf %22, %26 : vector<8x256xf32>
    %28 = vector.broadcast %6 : vector<1x256xf32> to vector<8x256xf32>
    %29 = arith.mulf %27, %28 : vector<8x256xf32>
    %30 = vector.broadcast %7 : vector<1x256xf32> to vector<8x256xf32>
    %31 = arith.addf %29, %30 : vector<8x256xf32>
    %32 = arith.truncf %31 : vector<8x256xf32> to vector<8x256xbf16>
    %c0_15 = arith.constant 0 : index
    %c0_16 = arith.constant 0 : index
    %33 = vector.load %arg6[%c0_15, %c0_16] : memref<256x256xbf16, #tpu.memory_space<vmem>>, vector<256x256xbf16>
    %cst_17 = arith.constant dense<0.000000e+00> : vector<8x256xf32>
    %34 = tpu.matmul %32, %33, %cst_17 {dimension_numbers = #tpu.dot_dimension_numbers<[1], [0], [0], [1], [0, 0, 1, 1], [], []>} : vector<8x256xbf16>, vector<256x256xbf16>, vector<8x256xf32> -> vector<8x256xf32>
    %c0_18 = arith.constant 0 : index
    %c0_19 = arith.constant 0 : index
    %35 = vector.load %arg7[%c0_18, %c0_19] : memref<1x256xf32, #tpu.memory_space<vmem>>, vector<1x256xf32>
    %36 = vector.broadcast %35 : vector<1x256xf32> to vector<8x256xf32>
    %37 = arith.addf %34, %36 : vector<8x256xf32>
    %c0_20 = arith.constant 0 : index
    %c0_21 = arith.constant 0 : index
    %38 = vector.load %arg8[%c0_20, %c0_21] : memref<1x256xf32, #tpu.memory_space<vmem>>, vector<1x256xf32>
    %c0_22 = arith.constant 0 : index
    %c0_23 = arith.constant 0 : index
    %39 = vector.load %arg9[%c0_22, %c0_23] : memref<1x256xf32, #tpu.memory_space<vmem>>, vector<1x256xf32>
    %cst_24 = arith.constant 0.000000e+00 : f32
    %40 = vector.broadcast %cst_24 : f32 to vector<8x256xf32>
    %41 = arith.maximumf %37, %40 : vector<8x256xf32>
    %cst_25 = arith.constant dense<0.000000e+00> : vector<8xf32>
    %42 = vector.multi_reduction <add>, %41, %cst_25 [1] : vector<8x256xf32> to vector<8xf32>
    %43 = vector.shape_cast %42 : vector<8xf32> to vector<8x1xf32>
    %44 = arith.mulf %41, %41 : vector<8x256xf32>
    %cst_26 = arith.constant dense<0.000000e+00> : vector<8xf32>
    %45 = vector.multi_reduction <add>, %44, %cst_26 [1] : vector<8x256xf32> to vector<8xf32>
    %46 = vector.shape_cast %45 : vector<8xf32> to vector<8x1xf32>
    %cst_27 = arith.constant 3.906250e-03 : f32
    %47 = vector.broadcast %cst_27 : f32 to vector<8x1xf32>
    %48 = arith.mulf %43, %47 : vector<8x1xf32>
    %cst_28 = arith.constant 3.906250e-03 : f32
    %49 = vector.broadcast %cst_28 : f32 to vector<8x1xf32>
    %50 = arith.mulf %46, %49 : vector<8x1xf32>
    %51 = arith.mulf %48, %48 : vector<8x1xf32>
    %52 = arith.subf %50, %51 : vector<8x1xf32>
    %53 = vector.broadcast %48 : vector<8x1xf32> to vector<8x256xf32>
    %54 = arith.subf %41, %53 : vector<8x256xf32>
    %cst_29 = arith.constant 9.99999974E-6 : f32
    %55 = vector.broadcast %cst_29 : f32 to vector<8x1xf32>
    %56 = arith.addf %52, %55 : vector<8x1xf32>
    %57 = math.rsqrt %56 : vector<8x1xf32>
    %58 = vector.broadcast %57 : vector<8x1xf32> to vector<8x256xf32>
    %59 = arith.mulf %54, %58 : vector<8x256xf32>
    %60 = vector.broadcast %38 : vector<1x256xf32> to vector<8x256xf32>
    %61 = arith.mulf %59, %60 : vector<8x256xf32>
    %62 = vector.broadcast %39 : vector<1x256xf32> to vector<8x256xf32>
    %63 = arith.addf %61, %62 : vector<8x256xf32>
    %64 = arith.truncf %63 : vector<8x256xf32> to vector<8x256xbf16>
    %c0_30 = arith.constant 0 : index
    %c0_31 = arith.constant 0 : index
    %65 = vector.load %arg10[%c0_30, %c0_31] : memref<256x256xbf16, #tpu.memory_space<vmem>>, vector<256x256xbf16>
    %cst_32 = arith.constant dense<0.000000e+00> : vector<8x256xf32>
    %66 = tpu.matmul %64, %65, %cst_32 {dimension_numbers = #tpu.dot_dimension_numbers<[1], [0], [0], [1], [0, 0, 1, 1], [], []>} : vector<8x256xbf16>, vector<256x256xbf16>, vector<8x256xf32> -> vector<8x256xf32>
    %c0_33 = arith.constant 0 : index
    %c0_34 = arith.constant 0 : index
    %67 = vector.load %arg11[%c0_33, %c0_34] : memref<1x256xf32, #tpu.memory_space<vmem>>, vector<1x256xf32>
    %68 = vector.broadcast %67 : vector<1x256xf32> to vector<8x256xf32>
    %69 = arith.addf %66, %68 : vector<8x256xf32>
    %c0_35 = arith.constant 0 : index
    %c0_36 = arith.constant 0 : index
    %70 = vector.load %arg12[%c0_35, %c0_36] : memref<1x256xf32, #tpu.memory_space<vmem>>, vector<1x256xf32>
    %c0_37 = arith.constant 0 : index
    %c0_38 = arith.constant 0 : index
    %71 = vector.load %arg13[%c0_37, %c0_38] : memref<1x256xf32, #tpu.memory_space<vmem>>, vector<1x256xf32>
    %cst_39 = arith.constant 0.000000e+00 : f32
    %72 = vector.broadcast %cst_39 : f32 to vector<8x256xf32>
    %73 = arith.maximumf %69, %72 : vector<8x256xf32>
    %cst_40 = arith.constant dense<0.000000e+00> : vector<8xf32>
    %74 = vector.multi_reduction <add>, %73, %cst_40 [1] : vector<8x256xf32> to vector<8xf32>
    %75 = vector.shape_cast %74 : vector<8xf32> to vector<8x1xf32>
    %76 = arith.mulf %73, %73 : vector<8x256xf32>
    %cst_41 = arith.constant dense<0.000000e+00> : vector<8xf32>
    %77 = vector.multi_reduction <add>, %76, %cst_41 [1] : vector<8x256xf32> to vector<8xf32>
    %78 = vector.shape_cast %77 : vector<8xf32> to vector<8x1xf32>
    %cst_42 = arith.constant 3.906250e-03 : f32
    %79 = vector.broadcast %cst_42 : f32 to vector<8x1xf32>
    %80 = arith.mulf %75, %79 : vector<8x1xf32>
    %cst_43 = arith.constant 3.906250e-03 : f32
    %81 = vector.broadcast %cst_43 : f32 to vector<8x1xf32>
    %82 = arith.mulf %78, %81 : vector<8x1xf32>
    %83 = arith.mulf %80, %80 : vector<8x1xf32>
    %84 = arith.subf %82, %83 : vector<8x1xf32>
    %85 = vector.broadcast %80 : vector<8x1xf32> to vector<8x256xf32>
    %86 = arith.subf %73, %85 : vector<8x256xf32>
    %cst_44 = arith.constant 9.99999974E-6 : f32
    %87 = vector.broadcast %cst_44 : f32 to vector<8x1xf32>
    %88 = arith.addf %84, %87 : vector<8x1xf32>
    %89 = math.rsqrt %88 : vector<8x1xf32>
    %90 = vector.broadcast %89 : vector<8x1xf32> to vector<8x256xf32>
    %91 = arith.mulf %86, %90 : vector<8x256xf32>
    %92 = vector.broadcast %70 : vector<1x256xf32> to vector<8x256xf32>
    %93 = arith.mulf %91, %92 : vector<8x256xf32>
    %94 = vector.broadcast %71 : vector<1x256xf32> to vector<8x256xf32>
    %95 = arith.addf %93, %94 : vector<8x256xf32>
    %96 = arith.truncf %95 : vector<8x256xf32> to vector<8x256xbf16>
    %c0_45 = arith.constant 0 : index
    %c0_46 = arith.constant 0 : index
    %97 = vector.load %arg14[%c0_45, %c0_46] : memref<256x128xbf16, #tpu.memory_space<vmem>>, vector<256x128xbf16>
    %cst_47 = arith.constant dense<0.000000e+00> : vector<8x128xf32>
    %98 = tpu.matmul %96, %97, %cst_47 {dimension_numbers = #tpu.dot_dimension_numbers<[1], [0], [0], [1], [0, 0, 1, 1], [], []>} : vector<8x256xbf16>, vector<256x128xbf16>, vector<8x128xf32> -> vector<8x128xf32>
    %c0_48 = arith.constant 0 : index
    %c0_49 = arith.constant 0 : index
    %99 = vector.load %arg15[%c0_48, %c0_49] : memref<1x128xf32, #tpu.memory_space<vmem>>, vector<1x128xf32>
    %100 = vector.broadcast %99 : vector<1x128xf32> to vector<8x128xf32>
    %101 = arith.addf %98, %100 : vector<8x128xf32>
    %c0_50 = arith.constant 0 : index
    %c0_51 = arith.constant 0 : index
    %102 = vector.load %arg16[%c0_50, %c0_51] : memref<8x128xf32, #tpu.memory_space<vmem>>, vector<8x128xf32>
    tpu.vector_store %arg16[%c0_50, %c0_51], %101 {strides = array<i32>} : memref<8x128xf32, #tpu.memory_space<vmem>>, vector<8x128xf32>,
    return
  }
  func.func @transform_0(%arg0: i32) -> (i32, i32) {
    %c0_i32 = arith.constant 0 : i32
    %c0_i32_0 = arith.constant 0 : i32
    return %arg0, %c0_i32 : i32, i32
  }
  func.func @transform_1(%arg0: i32) -> (i32, i32) {
    %c0_i32 = arith.constant 0 : i32
    %c0_i32_0 = arith.constant 0 : i32
    %c0_i32_1 = arith.constant 0 : i32
    return %c0_i32, %c0_i32_0 : i32, i32
  }
  func.func @transform_2(%arg0: i32) -> (i32, i32) {
    %c0_i32 = arith.constant 0 : i32
    %c0_i32_0 = arith.constant 0 : i32
    %c0_i32_1 = arith.constant 0 : i32
    return %c0_i32, %c0_i32_0 : i32, i32
  }
  func.func @transform_3(%arg0: i32) -> (i32, i32) {
    %c0_i32 = arith.constant 0 : i32
    %c0_i32_0 = arith.constant 0 : i32
    %c0_i32_1 = arith.constant 0 : i32
    return %c0_i32, %c0_i32_0 : i32, i32
  }
  func.func @transform_4(%arg0: i32) -> (i32, i32) {
    %c0_i32 = arith.constant 0 : i32
    %c0_i32_0 = arith.constant 0 : i32
    %c0_i32_1 = arith.constant 0 : i32
    return %c0_i32, %c0_i32_0 : i32, i32
  }
  func.func @transform_5(%arg0: i32) -> (i32, i32) {
    %c0_i32 = arith.constant 0 : i32
    %c0_i32_0 = arith.constant 0 : i32
    %c0_i32_1 = arith.constant 0 : i32
    return %c0_i32, %c0_i32_0 : i32, i32
  }
  func.func @transform_6(%arg0: i32) -> (i32, i32) {
    %c0_i32 = arith.constant 0 : i32
    %c0_i32_0 = arith.constant 0 : i32
    %c0_i32_1 = arith.constant 0 : i32
    return %c0_i32, %c0_i32_0 : i32, i32
  }
  func.func @transform_7(%arg0: i32) -> (i32, i32) {
    %c0_i32 = arith.constant 0 : i32
    %c0_i32_0 = arith.constant 0 : i32
    %c0_i32_1 = arith.constant 0 : i32
    return %c0_i32, %c0_i32_0 : i32, i32
  }
  func.func @transform_8(%arg0: i32) -> (i32, i32) {
    %c0_i32 = arith.constant 0 : i32
    %c0_i32_0 = arith.constant 0 : i32
    %c0_i32_1 = arith.constant 0 : i32
    return %c0_i32, %c0_i32_0 : i32, i32
  }
  func.func @transform_9(%arg0: i32) -> (i32, i32) {
    %c0_i32 = arith.constant 0 : i32
    %c0_i32_0 = arith.constant 0 : i32
    %c0_i32_1 = arith.constant 0 : i32
    return %c0_i32, %c0_i32_0 : i32, i32
  }
  func.func @transform_10(%arg0: i32) -> (i32, i32) {
    %c0_i32 = arith.constant 0 : i32
    %c0_i32_0 = arith.constant 0 : i32
    %c0_i32_1 = arith.constant 0 : i32
    return %c0_i32, %c0_i32_0 : i32, i32
  }
  func.func @transform_11(%arg0: i32) -> (i32, i32) {
    %c0_i32 = arith.constant 0 : i32
    %c0_i32_0 = arith.constant 0 : i32
    %c0_i32_1 = arith.constant 0 : i32
    return %c0_i32, %c0_i32_0 : i32, i32
  }
  func.func @transform_12(%arg0: i32) -> (i32, i32) {
    %c0_i32 = arith.constant 0 : i32
    %c0_i32_0 = arith.constant 0 : i32
    %c0_i32_1 = arith.constant 0 : i32
    return %c0_i32, %c0_i32_0 : i32, i32
  }
  func.func @transform_13(%arg0: i32) -> (i32, i32) {
    %c0_i32 = arith.constant 0 : i32
    %c0_i32_0 = arith.constant 0 : i32
    %c0_i32_1 = arith.constant 0 : i32
    return %c0_i32, %c0_i32_0 : i32, i32
  }
  func.func @transform_14(%arg0: i32) -> (i32, i32) {
    %c0_i32 = arith.constant 0 : i32
    %c0_i32_0 = arith.constant 0 : i32
    %c0_i32_1 = arith.constant 0 : i32
    return %c0_i32, %c0_i32_0 : i32, i32
  }
  func.func @transform_15(%arg0: i32) -> (i32, i32) {
    %c0_i32 = arith.constant 0 : i32
    %c0_i32_0 = arith.constant 0 : i32
    return %arg0, %c0_i32 : i32, i32
  }
}

</mosaic_0001>

<llo_original>
// kernel: tpu_custom_call.1
$region0: #{tpu_custom_call.1}
  #allocation0 [shape = 'u32[]', space=smem, size = 0x4, offset = 0x4, fixed_abs, tag = 'smem constant byte address 0x4 - core index']
  #allocation1 [shape = 'u32[144,128]{1,0:T(1,128)}', space=vmem, size = 0x12000, scoped, tag = 'internal scratch']
  %s0 = inlined_call_operand.hbm [shape: bf16[8,896], index: 0, kind: input, shape index: {}]
  %s1 = inlined_call_operand.hbm [shape: bf16[896,256], index: 1, kind: input, shape index: {}]
  %s2 = inlined_call_operand.vmem [shape: f32[1,256], index: 2, kind: input, shape index: {}]
  %s3 = inlined_call_operand.vmem [shape: f32[1,256], index: 3, kind: input, shape index: {}]
  %s4 = inlined_call_operand.vmem [shape: f32[1,256], index: 4, kind: input, shape index: {}]
  %s5 = inlined_call_operand.hbm [shape: bf16[256,256], index: 5, kind: input, shape index: {}]
  %s6 = inlined_call_operand.vmem [shape: f32[1,256], index: 6, kind: input, shape index: {}]
  %s7 = inlined_call_operand.vmem [shape: f32[1,256], index: 7, kind: input, shape index: {}]
  %s8 = inlined_call_operand.vmem [shape: f32[1,256], index: 8, kind: input, shape index: {}]
  %s9 = inlined_call_operand.hbm [shape: bf16[256,256], index: 9, kind: input, shape index: {}]
  %s10 = inlined_call_operand.vmem [shape: f32[1,256], index: 10, kind: input, shape index: {}]
  %s11 = inlined_call_operand.vmem [shape: f32[1,256], index: 11, kind: input, shape index: {}]
  %s12 = inlined_call_operand.vmem [shape: f32[1,256], index: 12, kind: input, shape index: {}]
  %s13 = inlined_call_operand.hbm [shape: bf16[256,128], index: 13, kind: input, shape index: {}]
  %s14 = inlined_call_operand.vmem [shape: f32[1,128], index: 14, kind: input, shape index: {}]
  %s15 = inlined_call_operand.hbm [shape: f32[8,128], index: 15, kind: output, shape index: {}]
  %s16 = sld [smem:[#allocation0]]
  $region90: #{tpu_custom_call.1} parent=0
    _
  %s18 = ssub.s32 1, %s16
  %s19 = scalar_select 0, %s18, %s16
  $region1: #{tpu_custom_call.1} parent=0
    #allocation2 [shape = 'u8[14336]{0}', space=vmem, size = 0x3800, scoped, tag = 'input window, operand 0, single buffered']
    #allocation3 [shape = 's32[1]{0}', space=sflag, size = 0x4, scoped, tag = 'scoped memory for tpu_custom_call.1']
    #allocation4 [shape = 's32[1]{0}', space=sflag, size = 0x4, scoped, tag = 'scoped memory for tpu_custom_call.1']
    #allocation5 [shape = 'u8[458752]{0}', space=vmem, size = 0x70000, scoped, tag = 'input window, operand 1, single buffered']
    #allocation6 [shape = 's32[1]{0}', space=sflag, size = 0x4, scoped, tag = 'scoped memory for tpu_custom_call.1']
    #allocation7 [shape = 'u8[131072]{0}', space=vmem, size = 0x20000, scoped, tag = 'input window, operand 5, single buffered']
    #allocation8 [shape = 'u8[131072]{0}', space=vmem, size = 0x20000, scoped, tag = 'input window, operand 9, single buffered']
    #allocation9 [shape = 's32[1]{0}', space=sflag, size = 0x4, scoped, tag = 'scoped memory for tpu_custom_call.1']
    #allocation10 [shape = 'u8[65536]{0}', space=vmem, size = 0x10000, scoped, tag = 'input window, operand 13, single buffered']
    #allocation11 [shape = 'u8[4096]{0}', space=vmem, size = 0x1000, scoped, tag = 'output window, operand 0, single buffered']
    %20 = vsyncpa [#allocation3], 0
    %21 = vsyncpa [#allocation6], 0
    %22 = vsyncpa [#allocation9], 0
    %23 = vsyncpa [#allocation4], 0
    // Predicated region
    $region2: #{tpu_custom_call.1} parent=1 // pred_check
      _
    $region3: #{tpu_custom_call.1} parent=1 // pred_check_branch
      %25 = sbr.rel (0) target = $region5
    $region4: #{tpu_custom_call.1} parent=1 // pred_region
      %s27 = ssub.s32 448, 448
      %28 = vsyncadd [#allocation3], %s27
      %s30 = sshll.u32 [#allocation2], 4
      %s31 = int_to_ptr.vmem [resolvable:$true] %s30
      %33 = dma.hbm_to_vmem [thread:$0]  %s0, 448, %s31, [#allocation3]
    $region5: #{tpu_custom_call.1} parent=1 // pred_fallthru
      _
    // Predicated region
    $region6: #{tpu_custom_call.1} parent=1 // pred_check
      _
    $region7: #{tpu_custom_call.1} parent=1 // pred_check_branch
      %35 = sbr.rel (0) target = $region9
    $region8: #{tpu_custom_call.1} parent=1 // pred_region
      %s37 = ssub.s32 14336, 14336
      %38 = vsyncadd [#allocation6], %s37
      %s39 = sshll.u32 [#allocation5], 4
      %s40 = int_to_ptr.vmem [resolvable:$true] %s39
      %45 = dma.hbm_to_vmem [thread:$0]  %s1, 14336, %s40, [#allocation6], 128, 128, 8
    $region9: #{tpu_custom_call.1} parent=1 // pred_fallthru
      _
    // Predicated region
    $region10: #{tpu_custom_call.1} parent=1 // pred_check
      _
    $region11: #{tpu_custom_call.1} parent=1 // pred_check_branch
      %47 = sbr.rel (0) target = $region13
    $region12: #{tpu_custom_call.1} parent=1 // pred_region
      _
    $region13: #{tpu_custom_call.1} parent=1 // pred_fallthru
      _
    // Predicated region
    $region14: #{tpu_custom_call.1} parent=1 // pred_check
      _
    $region15: #{tpu_custom_call.1} parent=1 // pred_check_branch
      %49 = sbr.rel (0) target = $region17
    $region16: #{tpu_custom_call.1} parent=1 // pred_region
      _
    $region17: #{tpu_custom_call.1} parent=1 // pred_fallthru
      _
    // Predicated region
    $region18: #{tpu_custom_call.1} parent=1 // pred_check
      _
    $region19: #{tpu_custom_call.1} parent=1 // pred_check_branch
      %51 = sbr.rel (0) target = $region21
    $region20: #{tpu_custom_call.1} parent=1 // pred_region
      _
    $region21: #{tpu_custom_call.1} parent=1 // pred_fallthru
      _
    // Predicated region
    $region22: #{tpu_custom_call.1} parent=1 // pred_check
      _
    $region23: #{tpu_custom_call.1} parent=1 // pred_check_branch
      %53 = sbr.rel (0) target = $region25
    $region24: #{tpu_custom_call.1} parent=1 // pred_region
      %s55 = ssub.s32 4096, 4096
      %56 = vsyncadd [#allocation6], %s55
      %s57 = sshll.u32 [#allocation7], 4
      %s58 = int_to_ptr.vmem [resolvable:$true] %s57
      %63 = dma.hbm_to_vmem [thread:$0]  %s5, 4096, %s58, [#allocation6], 128, 128, 8
    $region25: #{tpu_custom_call.1} parent=1 // pred_fallthru
      _
    // Predicated region
    $region26: #{tpu_custom_call.1} parent=1 // pred_check
      _
    $region27: #{tpu_custom_call.1} parent=1 // pred_check_branch
      %65 = sbr.rel (0) target = $region29
    $region28: #{tpu_custom_call.1} parent=1 // pred_region
      _
    $region29: #{tpu_custom_call.1} parent=1 // pred_fallthru
      _
    // Predicated region
    $region30: #{tpu_custom_call.1} parent=1 // pred_check
      _
    $region31: #{tpu_custom_call.1} parent=1 // pred_check_branch
      %67 = sbr.rel (0) target = $region33
    $region32: #{tpu_custom_call.1} parent=1 // pred_region
      _
    $region33: #{tpu_custom_call.1} parent=1 // pred_fallthru
      _
    // Predicated region
    $region34: #{tpu_custom_call.1} parent=1 // pred_check
      _
    $region35: #{tpu_custom_call.1} parent=1 // pred_check_branch
      %69 = sbr.rel (0) target = $region37
    $region36: #{tpu_custom_call.1} parent=1 // pred_region
      _
    $region37: #{tpu_custom_call.1} parent=1 // pred_fallthru
      _
    // Predicated region
    $region38: #{tpu_custom_call.1} parent=1 // pred_check
      _
    $region39: #{tpu_custom_call.1} parent=1 // pred_check_branch
      %71 = sbr.rel (0) target = $region41
    $region40: #{tpu_custom_call.1} parent=1 // pred_region
      %s73 = ssub.s32 4096, 4096
      %74 = vsyncadd [#allocation9], %s73
      %s75 = sshll.u32 [#allocation8], 4
      %s76 = int_to_ptr.vmem [resolvable:$true] %s75
      %81 = dma.hbm_to_vmem [thread:$0]  %s9, 4096, %s76, [#allocation9], 128, 128, 8
    $region41: #{tpu_custom_call.1} parent=1 // pred_fallthru
      _
    // Predicated region
    $region42: #{tpu_custom_call.1} parent=1 // pred_check
      _
    $region43: #{tpu_custom_call.1} parent=1 // pred_check_branch
      %83 = sbr.rel (0) target = $region45
    $region44: #{tpu_custom_call.1} parent=1 // pred_region
      _
    $region45: #{tpu_custom_call.1} parent=1 // pred_fallthru
      _
    // Predicated region
    $region46: #{tpu_custom_call.1} parent=1 // pred_check
      _
    $region47: #{tpu_custom_call.1} parent=1 // pred_check_branch
      %85 = sbr.rel (0) target = $region49
    $region48: #{tpu_custom_call.1} parent=1 // pred_region
      _
    $region49: #{tpu_custom_call.1} parent=1 // pred_fallthru
      _
    // Predicated region
    $region50: #{tpu_custom_call.1} parent=1 // pred_check
      _
    $region51: #{tpu_custom_call.1} parent=1 // pred_check_branch
      %87 = sbr.rel (0) target = $region53
    $region52: #{tpu_custom_call.1} parent=1 // pred_region
      _
    $region53: #{tpu_custom_call.1} parent=1 // pred_fallthru
      _
    // Predicated region
    $region54: #{tpu_custom_call.1} parent=1 // pred_check
      _
    $region55: #{tpu_custom_call.1} parent=1 // pred_check_branch
      %89 = sbr.rel (0) target = $region57
    $region56: #{tpu_custom_call.1} parent=1 // pred_region
      %s91 = ssub.s32 2048, 2048
      %92 = vsyncadd [#allocation9], %s91
      %s93 = sshll.u32 [#allocation10], 4
      %s94 = int_to_ptr.vmem [resolvable:$true] %s93
      %99 = dma.hbm_to_vmem [thread:$0]  %s13, 2048, %s94, [#allocation9], 64, 64, 4
    $region57: #{tpu_custom_call.1} parent=1 // pred_fallthru
      _
    // Predicated region
    $region58: #{tpu_custom_call.1} parent=1 // pred_check
      _
    $region59: #{tpu_custom_call.1} parent=1 // pred_check_branch
      %101 = sbr.rel (0) target = $region61
    $region60: #{tpu_custom_call.1} parent=1 // pred_region
      _
    $region61: #{tpu_custom_call.1} parent=1 // pred_fallthru
      _
    // Predicated region
    $region62: #{tpu_custom_call.1} parent=1 // pred_check
      _
    $region63: #{tpu_custom_call.1} parent=1 // pred_check_branch
      %103 = sbr.rel (0) target = $region65
    $region64: #{tpu_custom_call.1} parent=1 // pred_region
      %104 = dma.done [#allocation3], 448
    $region65: #{tpu_custom_call.1} parent=1 // pred_fallthru
      _
    // Predicated region
    $region66: #{tpu_custom_call.1} parent=1 // pred_check
      _
    $region67: #{tpu_custom_call.1} parent=1 // pred_check_branch
      %106 = sbr.rel (0) target = $region69
    $region68: #{tpu_custom_call.1} parent=1 // pred_region
      %107 = dma.done [#allocation6], 14336
    $region69: #{tpu_custom_call.1} parent=1 // pred_fallthru
      _
    // Predicated region
    $region70: #{tpu_custom_call.1} parent=1 // pred_check
      _
    $region71: #{tpu_custom_call.1} parent=1 // pred_check_branch
      %109 = sbr.rel (0) target = $region73
    $region72: #{tpu_custom_call.1} parent=1 // pred_region
      %110 = dma.done [#allocation6], 4096
    $region73: #{tpu_custom_call.1} parent=1 // pred_fallthru
      _
    // Predicated region
    $region74: #{tpu_custom_call.1} parent=1 // pred_check
      _
    $region75: #{tpu_custom_call.1} parent=1 // pred_check_branch
      %112 = sbr.rel (0) target = $region77
    $region76: #{tpu_custom_call.1} parent=1 // pred_region
      %113 = dma.done [#allocation9], 4096
    $region77: #{tpu_custom_call.1} parent=1 // pred_fallthru
      _
    // Predicated region
    $region78: #{tpu_custom_call.1} parent=1 // pred_check
      _
    $region79: #{tpu_custom_call.1} parent=1 // pred_check_branch
      %115 = sbr.rel (0) target = $region81
    $region80: #{tpu_custom_call.1} parent=1 // pred_region
      %116 = dma.done [#allocation9], 2048
    $region81: #{tpu_custom_call.1} parent=1 // pred_fallthru
      _
    %v118 = vld [vmem:[#allocation2] sm:$0xff]
    %v119 = vld [vmem:[#allocation2 + $0x8] sm:$0xff]
    %v120 = vld [vmem:[#allocation2 + $0x10] sm:$0xff]
    %v121 = vld [vmem:[#allocation2 + $0x18] sm:$0xf]
    %v122 = vld [vmem:[#allocation5] sm:$0xff]
    %v123 = vld [vmem:[#allocation5 + $0x8] sm:$0xff]
    %v124 = vld [vmem:[#allocation5 + $0x10] sm:$0xff]
    %v125 = vld [vmem:[#allocation5 + $0x18] sm:$0xff]
    %v126 = vld [vmem:[#allocation5 + $0x20] sm:$0xff]
    %v127 = vld [vmem:[#allocation5 + $0x28] sm:$0xff]
    %v128 = vld [vmem:[#allocation5 + $0x30] sm:$0xff]
    %v129 = vld [vmem:[#allocation5 + $0x38] sm:$0xff]
    %v130 = vld [vmem:[#allocation5 + $0x40] sm:$0xff]
    %v131 = vld [vmem:[#allocation5 + $0x48] sm:$0xff]
    %v132 = vld [vmem:[#allocation5 + $0x50] sm:$0xff]
    %v133 = vld [vmem:[#allocation5 + $0x58] sm:$0xff]
    %v134 = vld [vmem:[#allocation5 + $0x60] sm:$0xff]
    %v135 = vld [vmem:[#allocation5 + $0x68] sm:$0xff]
    %v136 = vld [vmem:[#allocation5 + $0x70] sm:$0xff]
    %v137 = vld [vmem:[#allocation5 + $0x78] sm:$0xff]
    %v138 = vld [vmem:[#allocation5 + $0x80] sm:$0xff]
    %v139 = vld [vmem:[#allocation5 + $0x88] sm:$0xff]
    %v140 = vld [vmem:[#allocation5 + $0x90] sm:$0xff]
    %v141 = vld [vmem:[#allocation5 + $0x98] sm:$0xff]
    %v142 = vld [vmem:[#allocation5 + $0xa0] sm:$0xff]
    %v143 = vld [vmem:[#allocation5 + $0xa8] sm:$0xff]
    %v144 = vld [vmem:[#allocation5 + $0xb0] sm:$0xff]
    %v145 = vld [vmem:[#allocation5 + $0xb8] sm:$0xff]
    %v146 = vld [vmem:[#allocation5 + $0xc0] sm:$0xff]
    %v147 = vld [vmem:[#allocation5 + $0xc8] sm:$0xff]
    %v148 = vld [vmem:[#allocation5 + $0xd0] sm:$0xff]
    %v149 = vld [vmem:[#allocation5 + $0xd8] sm:$0xff]
    %v150 = vld [vmem:[#allocation5 + $0xe0] sm:$0xff]
    %v151 = vld [vmem:[#allocation5 + $0xe8] sm:$0xff]
    %v152 = vld [vmem:[#allocation5 + $0xf0] sm:$0xff]
    %v153 = vld [vmem:[#allocation5 + $0xf8] sm:$0xff]
    %v154 = vld [vmem:[#allocation5 + $0x100] sm:$0xff]
    %v155 = vld [vmem:[#allocation5 + $0x108] sm:$0xff]
    %v156 = vld [vmem:[#allocation5 + $0x110] sm:$0xff]
    %v157 = vld [vmem:[#allocation5 + $0x118] sm:$0xff]
    %v158 = vld [vmem:[#allocation5 + $0x120] sm:$0xff]
    %v159 = vld [vmem:[#allocation5 + $0x128] sm:$0xff]
    %v160 = vld [vmem:[#allocation5 + $0x130] sm:$0xff]
    %v161 = vld [vmem:[#allocation5 + $0x138] sm:$0xff]
    %v162 = vld [vmem:[#allocation5 + $0x140] sm:$0xff]
    %v163 = vld [vmem:[#allocation5 + $0x148] sm:$0xff]
    %v164 = vld [vmem:[#allocation5 + $0x150] sm:$0xff]
    %v165 = vld [vmem:[#allocation5 + $0x158] sm:$0xff]
    %v166 = vld [vmem:[#allocation5 + $0x160] sm:$0xff]
    %v167 = vld [vmem:[#allocation5 + $0x168] sm:$0xff]
    %v168 = vld [vmem:[#allocation5 + $0x170] sm:$0xff]
    %v169 = vld [vmem:[#allocation5 + $0x178] sm:$0xff]
    %v170 = vld [vmem:[#allocation5 + $0x180] sm:$0xff]
    %v171 = vld [vmem:[#allocation5 + $0x188] sm:$0xff]
    %v172 = vld [vmem:[#allocation5 + $0x190] sm:$0xff]
    %v173 = vld [vmem:[#allocation5 + $0x198] sm:$0xff]
    %v174 = vld [vmem:[#allocation5 + $0x1a0] sm:$0xff]
    %v175 = vld [vmem:[#allocation5 + $0x1a8] sm:$0xff]
    %v176 = vld [vmem:[#allocation5 + $0x1b0] sm:$0xff]
    %v177 = vld [vmem:[#allocation5 + $0x1b8] sm:$0xff]
    %v178 = vld [vmem:[#allocation5 + $0x1c0] sm:$0xff]
    %v179 = vld [vmem:[#allocation5 + $0x1c8] sm:$0xff]
    %v180 = vld [vmem:[#allocation5 + $0x1d0] sm:$0xff]
    %v181 = vld [vmem:[#allocation5 + $0x1d8] sm:$0xff]
    %v182 = vld [vmem:[#allocation5 + $0x1e0] sm:$0xff]
    %v183 = vld [vmem:[#allocation5 + $0x1e8] sm:$0xff]
    %v184 = vld [vmem:[#allocation5 + $0x1f0] sm:$0xff]
    %v185 = vld [vmem:[#allocation5 + $0x1f8] sm:$0xff]
    %v186 = vld [vmem:[#allocation5 + $0x200] sm:$0xff]
    %v187 = vld [vmem:[#allocation5 + $0x208] sm:$0xff]
    %v188 = vld [vmem:[#allocation5 + $0x210] sm:$0xff]
    %v189 = vld [vmem:[#allocation5 + $0x218] sm:$0xff]
    %v190 = vld [vmem:[#allocation5 + $0x220] sm:$0xff]
    %v191 = vld [vmem:[#allocation5 + $0x228] sm:$0xff]
    %v192 = vld [vmem:[#allocation5 + $0x230] sm:$0xff]
    %v193 = vld [vmem:[#allocation5 + $0x238] sm:$0xff]
    %v194 = vld [vmem:[#allocation5 + $0x240] sm:$0xff]
    %v195 = vld [vmem:[#allocation5 + $0x248] sm:$0xff]
    %v196 = vld [vmem:[#allocation5 + $0x250] sm:$0xff]
    %v197 = vld [vmem:[#allocation5 + $0x258] sm:$0xff]
    %v198 = vld [vmem:[#allocation5 + $0x260] sm:$0xff]
    %v199 = vld [vmem:[#allocation5 + $0x268] sm:$0xff]
    %v200 = vld [vmem:[#allocation5 + $0x270] sm:$0xff]
    %v201 = vld [vmem:[#allocation5 + $0x278] sm:$0xff]
    %v202 = vld [vmem:[#allocation5 + $0x280] sm:$0xff]
    %v203 = vld [vmem:[#allocation5 + $0x288] sm:$0xff]
    %v204 = vld [vmem:[#allocation5 + $0x290] sm:$0xff]
    %v205 = vld [vmem:[#allocation5 + $0x298] sm:$0xff]
    %v206 = vld [vmem:[#allocation5 + $0x2a0] sm:$0xff]
    %v207 = vld [vmem:[#allocation5 + $0x2a8] sm:$0xff]
    %v208 = vld [vmem:[#allocation5 + $0x2b0] sm:$0xff]
    %v209 = vld [vmem:[#allocation5 + $0x2b8] sm:$0xff]
    %v210 = vld [vmem:[#allocation5 + $0x2c0] sm:$0xff]
    %v211 = vld [vmem:[#allocation5 + $0x2c8] sm:$0xff]
    %v212 = vld [vmem:[#allocation5 + $0x2d0] sm:$0xff]
    %v213 = vld [vmem:[#allocation5 + $0x2d8] sm:$0xff]
    %v214 = vld [vmem:[#allocation5 + $0x2e0] sm:$0xff]
    %v215 = vld [vmem:[#allocation5 + $0x2e8] sm:$0xff]
    %v216 = vld [vmem:[#allocation5 + $0x2f0] sm:$0xff]
    %v217 = vld [vmem:[#allocation5 + $0x2f8] sm:$0xff]
    %v218 = vld [vmem:[#allocation5 + $0x300] sm:$0xff]
    %v219 = vld [vmem:[#allocation5 + $0x308] sm:$0xff]
    %v220 = vld [vmem:[#allocation5 + $0x310] sm:$0xff]
    %v221 = vld [vmem:[#allocation5 + $0x318] sm:$0xff]
    %v222 = vld [vmem:[#allocation5 + $0x320] sm:$0xff]
    %v223 = vld [vmem:[#allocation5 + $0x328] sm:$0xff]
    %v224 = vld [vmem:[#allocation5 + $0x330] sm:$0xff]
    %v225 = vld [vmem:[#allocation5 + $0x338] sm:$0xff]
    %v226 = vld [vmem:[#allocation5 + $0x340] sm:$0xff]
    %v227 = vld [vmem:[#allocation5 + $0x348] sm:$0xff]
    %v228 = vld [vmem:[#allocation5 + $0x350] sm:$0xff]
    %v229 = vld [vmem:[#allocation5 + $0x358] sm:$0xff]
    %v230 = vld [vmem:[#allocation5 + $0x360] sm:$0xff]
    %v231 = vld [vmem:[#allocation5 + $0x368] sm:$0xff]
    %v232 = vld [vmem:[#allocation5 + $0x370] sm:$0xff]
    %v233 = vld [vmem:[#allocation5 + $0x378] sm:$0xff]
    %v234 = vld [vmem:[%s2] sm:$0x3]
    %v236 = vlaneseq
    %v237 = vshrl.u32 %v236, 7
    %v238 = vsub.s32 0, %v237
    %v239 = vrot.slane %v234, %v238
    %v240 = vlaneseq
    %v241 = vshrl.u32 %v240, 7
    %v242 = vsub.s32 1, %v241
    %v243 = vrot.slane %v234, %v242
    %v250 = vunpack.c.l.b16 %v118
    %v251 = vunpack.c.h.b16 %v118
    %v252 = vunpack.c.l.b16 %v119
    %v253 = vunpack.c.h.b16 %v119
    %v254 = vunpack.c.l.b16 %v120
    %v255 = vunpack.c.h.b16 %v120
    %v256 = vunpack.c.l.b16 %v121
    %v257 = vpack.c.b16 %v250, %v250
    %v258 = vpack.c.b16 %v251, %v251
    %v259 = vpack.c.b16 %v252, %v252
    %v260 = vpack.c.b16 %v253, %v253
    %v261 = vpack.c.b16 %v254, %v254
    %v262 = vpack.c.b16 %v255, %v255
    %v263 = vpack.c.b16 %v256, %v256
    %v383 = vunpack.c.l.b16 %v122
    %v384 = vunpack.c.h.b16 %v122
    %v385 = vunpack.c.l.b16 %v123
    %v386 = vunpack.c.h.b16 %v123
    %v387 = vunpack.c.l.b16 %v124
    %v388 = vunpack.c.h.b16 %v124
    %v389 = vunpack.c.l.b16 %v125
    %v390 = vunpack.c.h.b16 %v125
    %v391 = vunpack.c.l.b16 %v126
    %v392 = vunpack.c.h.b16 %v126
    %v393 = vunpack.c.l.b16 %v127
    %v394 = vunpack.c.h.b16 %v127
    %v395 = vunpack.c.l.b16 %v128
    %v396 = vunpack.c.h.b16 %v128
    %v397 = vunpack.c.l.b16 %v129
    %v398 = vunpack.c.h.b16 %v129
    %v399 = vunpack.c.l.b16 %v130
    %v400 = vunpack.c.h.b16 %v130
    %v401 = vunpack.c.l.b16 %v131
    %v402 = vunpack.c.h.b16 %v131
    %v403 = vunpack.c.l.b16 %v132
    %v404 = vunpack.c.h.b16 %v132
    %v405 = vunpack.c.l.b16 %v133
    %v406 = vunpack.c.h.b16 %v133
    %v407 = vunpack.c.l.b16 %v134
    %v408 = vunpack.c.h.b16 %v134
    %v409 = vunpack.c.l.b16 %v135
    %v410 = vunpack.c.h.b16 %v135
    %v411 = vunpack.c.l.b16 %v136
    %v412 = vunpack.c.h.b16 %v136
    %v413 = vunpack.c.l.b16 %v137
    %v414 = vunpack.c.h.b16 %v137
    %v415 = vunpack.c.l.b16 %v138
    %v416 = vunpack.c.h.b16 %v138
    %v417 = vunpack.c.l.b16 %v139
    %v418 = vunpack.c.h.b16 %v139
    %v419 = vunpack.c.l.b16 %v140
    %v420 = vunpack.c.h.b16 %v140
    %v421 = vunpack.c.l.b16 %v141
    %v422 = vunpack.c.h.b16 %v141
    %v423 = vunpack.c.l.b16 %v142
    %v424 = vunpack.c.h.b16 %v142
    %v425 = vunpack.c.l.b16 %v143
    %v426 = vunpack.c.h.b16 %v143
    %v427 = vunpack.c.l.b16 %v144
    %v428 = vunpack.c.h.b16 %v144
    %v429 = vunpack.c.l.b16 %v145
    %v430 = vunpack.c.h.b16 %v145
    %v431 = vunpack.c.l.b16 %v146
    %v432 = vunpack.c.h.b16 %v146
    %v433 = vunpack.c.l.b16 %v147
    %v434 = vunpack.c.h.b16 %v147
    %v435 = vunpack.c.l.b16 %v148
    %v436 = vunpack.c.h.b16 %v148
    %v437 = vunpack.c.l.b16 %v149
    %v438 = vunpack.c.h.b16 %v149
    %v439 = vunpack.c.l.b16 %v150
    %v440 = vunpack.c.h.b16 %v150
    %v441 = vunpack.c.l.b16 %v151
    %v442 = vunpack.c.h.b16 %v151
    %v443 = vunpack.c.l.b16 %v152
    %v444 = vunpack.c.h.b16 %v152
    %v445 = vunpack.c.l.b16 %v153
    %v446 = vunpack.c.h.b16 %v153
    %v447 = vunpack.c.l.b16 %v154
    %v448 = vunpack.c.h.b16 %v154
    %v449 = vunpack.c.l.b16 %v155
    %v450 = vunpack.c.h.b16 %v155
    %v451 = vunpack.c.l.b16 %v156
    %v452 = vunpack.c.h.b16 %v156
    %v453 = vunpack.c.l.b16 %v157
    %v454 = vunpack.c.h.b16 %v157
    %v455 = vunpack.c.l.b16 %v158
    %v456 = vunpack.c.h.b16 %v158
    %v457 = vunpack.c.l.b16 %v159
    %v458 = vunpack.c.h.b16 %v159
    %v459 = vunpack.c.l.b16 %v160
    %v460 = vunpack.c.h.b16 %v160
    %v461 = vunpack.c.l.b16 %v161
    %v462 = vunpack.c.h.b16 %v161
    %v463 = vunpack.c.l.b16 %v162
    %v464 = vunpack.c.h.b16 %v162
    %v465 = vunpack.c.l.b16 %v163
    %v466 = vunpack.c.h.b16 %v163
    %v467 = vunpack.c.l.b16 %v164
    %v468 = vunpack.c.h.b16 %v164
    %v469 = vunpack.c.l.b16 %v165
    %v470 = vunpack.c.h.b16 %v165
    %v471 = vunpack.c.l.b16 %v166
    %v472 = vunpack.c.h.b16 %v166
    %v473 = vunpack.c.l.b16 %v167
    %v474 = vunpack.c.h.b16 %v167
    %v475 = vunpack.c.l.b16 %v168
    %v476 = vunpack.c.h.b16 %v168
    %v477 = vunpack.c.l.b16 %v169
    %v478 = vunpack.c.h.b16 %v169
    %v479 = vunpack.c.l.b16 %v170
    %v480 = vunpack.c.h.b16 %v170
    %v481 = vunpack.c.l.b16 %v171
    %v482 = vunpack.c.h.b16 %v171
    %v483 = vunpack.c.l.b16 %v172
    %v484 = vunpack.c.h.b16 %v172
    %v485 = vunpack.c.l.b16 %v173
    %v486 = vunpack.c.h.b16 %v173
    %v487 = vunpack.c.l.b16 %v174
    %v488 = vunpack.c.h.b16 %v174
    %v489 = vunpack.c.l.b16 %v175
    %v490 = vunpack.c.h.b16 %v175
    %v491 = vunpack.c.l.b16 %v176
    %v492 = vunpack.c.h.b16 %v176
    %v493 = vunpack.c.l.b16 %v177
    %v494 = vunpack.c.h.b16 %v177
    %v495 = vunpack.c.l.b16 %v178
    %v496 = vunpack.c.h.b16 %v178
    %v497 = vunpack.c.l.b16 %v179
    %v498 = vunpack.c.h.b16 %v179
    %v499 = vunpack.c.l.b16 %v180
    %v500 = vunpack.c.h.b16 %v180
    %v501 = vunpack.c.l.b16 %v181
    %v502 = vunpack.c.h.b16 %v181
    %v503 = vunpack.c.l.b16 %v182
    %v504 = vunpack.c.h.b16 %v182
    %v505 = vunpack.c.l.b16 %v183
    %v506 = vunpack.c.h.b16 %v183
    %v507 = vunpack.c.l.b16 %v184
    %v508 = vunpack.c.h.b16 %v184
    %v509 = vunpack.c.l.b16 %v185
    %v510 = vunpack.c.h.b16 %v185
    %v511 = vunpack.c.l.b16 %v186
    %v512 = vunpack.c.h.b16 %v186
    %v513 = vunpack.c.l.b16 %v187
    %v514 = vunpack.c.h.b16 %v187
    %v515 = vunpack.c.l.b16 %v188
    %v516 = vunpack.c.h.b16 %v188
    %v517 = vunpack.c.l.b16 %v189
    %v518 = vunpack.c.h.b16 %v189
    %v519 = vunpack.c.l.b16 %v190
    %v520 = vunpack.c.h.b16 %v190
    %v521 = vunpack.c.l.b16 %v191
    %v522 = vunpack.c.h.b16 %v191
    %v523 = vunpack.c.l.b16 %v192
    %v524 = vunpack.c.h.b16 %v192
    %v525 = vunpack.c.l.b16 %v193
    %v526 = vunpack.c.h.b16 %v193
    %v527 = vunpack.c.l.b16 %v194
    %v528 = vunpack.c.h.b16 %v194
    %v529 = vunpack.c.l.b16 %v195
    %v530 = vunpack.c.h.b16 %v195
    %v531 = vunpack.c.l.b16 %v196
    %v532 = vunpack.c.h.b16 %v196
    %v533 = vunpack.c.l.b16 %v197
    %v534 = vunpack.c.h.b16 %v197
    %v535 = vunpack.c.l.b16 %v198
    %v536 = vunpack.c.h.b16 %v198
    %v537 = vunpack.c.l.b16 %v199
    %v538 = vunpack.c.h.b16 %v199
    %v539 = vunpack.c.l.b16 %v200
    %v540 = vunpack.c.h.b16 %v200
    %v541 = vunpack.c.l.b16 %v201
    %v542 = vunpack.c.h.b16 %v201
    %v543 = vunpack.c.l.b16 %v202
    %v544 = vunpack.c.h.b16 %v202
    %v545 = vunpack.c.l.b16 %v203
    %v546 = vunpack.c.h.b16 %v203
    %v547 = vunpack.c.l.b16 %v204
    %v548 = vunpack.c.h.b16 %v204
    %v549 = vunpack.c.l.b16 %v205
    %v550 = vunpack.c.h.b16 %v205
    %v551 = vunpack.c.l.b16 %v206
    %v552 = vunpack.c.h.b16 %v206
    %v553 = vunpack.c.l.b16 %v207
    %v554 = vunpack.c.h.b16 %v207
    %v555 = vunpack.c.l.b16 %v208
    %v556 = vunpack.c.h.b16 %v208
    %v557 = vunpack.c.l.b16 %v209
    %v558 = vunpack.c.h.b16 %v209
    %v559 = vunpack.c.l.b16 %v210
    %v560 = vunpack.c.h.b16 %v210
    %v561 = vunpack.c.l.b16 %v211
    %v562 = vunpack.c.h.b16 %v211
    %v563 = vunpack.c.l.b16 %v212
    %v564 = vunpack.c.h.b16 %v212
    %v565 = vunpack.c.l.b16 %v213
    %v566 = vunpack.c.h.b16 %v213
    %v567 = vunpack.c.l.b16 %v214
    %v568 = vunpack.c.h.b16 %v214
    %v569 = vunpack.c.l.b16 %v215
    %v570 = vunpack.c.h.b16 %v215
    %v571 = vunpack.c.l.b16 %v216
    %v572 = vunpack.c.h.b16 %v216
    %v573 = vunpack.c.l.b16 %v217
    %v574 = vunpack.c.h.b16 %v217
    %v575 = vunpack.c.l.b16 %v218
    %v576 = vunpack.c.h.b16 %v218
    %v577 = vunpack.c.l.b16 %v219
    %v578 = vunpack.c.h.b16 %v219
    %v579 = vunpack.c.l.b16 %v220
    %v580 = vunpack.c.h.b16 %v220
    %v581 = vunpack.c.l.b16 %v221
    %v582 = vunpack.c.h.b16 %v221
    %v583 = vunpack.c.l.b16 %v222
    %v584 = vunpack.c.h.b16 %v222
    %v585 = vunpack.c.l.b16 %v223
    %v586 = vunpack.c.h.b16 %v223
    %v587 = vunpack.c.l.b16 %v224
    %v588 = vunpack.c.h.b16 %v224
    %v589 = vunpack.c.l.b16 %v225
    %v590 = vunpack.c.h.b16 %v225
    %v591 = vunpack.c.l.b16 %v226
    %v592 = vunpack.c.h.b16 %v226
    %v593 = vunpack.c.l.b16 %v227
    %v594 = vunpack.c.h.b16 %v227
    %v595 = vunpack.c.l.b16 %v228
    %v596 = vunpack.c.h.b16 %v228
    %v597 = vunpack.c.l.b16 %v229
    %v598 = vunpack.c.h.b16 %v229
    %v599 = vunpack.c.l.b16 %v230
    %v600 = vunpack.c.h.b16 %v230
    %v601 = vunpack.c.l.b16 %v231
    %v602 = vunpack.c.h.b16 %v231
    %v603 = vunpack.c.l.b16 %v232
    %v604 = vunpack.c.h.b16 %v232
    %v605 = vunpack.c.l.b16 %v233
    %v606 = vunpack.c.h.b16 %v233
    %v607 = vpack.c.b16 %v385, %v383
    %v608 = vpack.c.b16 %v386, %v384
    %v609 = vpack.c.b16 %v389, %v387
    %v610 = vpack.c.b16 %v390, %v388
    %v611 = vpack.c.b16 %v393, %v391
    %v612 = vpack.c.b16 %v394, %v392
    %v613 = vpack.c.b16 %v397, %v395
    %v614 = vpack.c.b16 %v398, %v396
    %v615 = vpack.c.b16 %v401, %v399
    %v616 = vpack.c.b16 %v402, %v400
    %v617 = vpack.c.b16 %v405, %v403
    %v618 = vpack.c.b16 %v406, %v404
    %v619 = vpack.c.b16 %v409, %v407
    %v620 = vpack.c.b16 %v410, %v408
    %v621 = vpack.c.b16 %v413, %v411
    %v622 = vpack.c.b16 %v414, %v412
    %v623 = vpack.c.b16 %v417, %v415
    %v624 = vpack.c.b16 %v418, %v416
    %v625 = vpack.c.b16 %v421, %v419
    %v626 = vpack.c.b16 %v422, %v420
    %v627 = vpack.c.b16 %v425, %v423
    %v628 = vpack.c.b16 %v426, %v424
    %v629 = vpack.c.b16 %v429, %v427
    %v630 = vpack.c.b16 %v430, %v428
    %v631 = vpack.c.b16 %v433, %v431
    %v632 = vpack.c.b16 %v434, %v432
    %v633 = vpack.c.b16 %v437, %v435
    %v634 = vpack.c.b16 %v438, %v436
    %v635 = vpack.c.b16 %v441, %v439
    %v636 = vpack.c.b16 %v442, %v440
    %v637 = vpack.c.b16 %v445, %v443
    %v638 = vpack.c.b16 %v446, %v444
    %v639 = vpack.c.b16 %v449, %v447
    %v640 = vpack.c.b16 %v450, %v448
    %v641 = vpack.c.b16 %v453, %v451
    %v642 = vpack.c.b16 %v454, %v452
    %v643 = vpack.c.b16 %v457, %v455
    %v644 = vpack.c.b16 %v458, %v456
    %v645 = vpack.c.b16 %v461, %v459
    %v646 = vpack.c.b16 %v462, %v460
    %v647 = vpack.c.b16 %v465, %v463
    %v648 = vpack.c.b16 %v466, %v464
    %v649 = vpack.c.b16 %v469, %v467
    %v650 = vpack.c.b16 %v470, %v468
    %v651 = vpack.c.b16 %v473, %v471
    %v652 = vpack.c.b16 %v474, %v472
    %v653 = vpack.c.b16 %v477, %v475
    %v654 = vpack.c.b16 %v478, %v476
    %v655 = vpack.c.b16 %v481, %v479
    %v656 = vpack.c.b16 %v482, %v480
    %v657 = vpack.c.b16 %v485, %v483
    %v658 = vpack.c.b16 %v486, %v484
    %v659 = vpack.c.b16 %v489, %v487
    %v660 = vpack.c.b16 %v490, %v488
    %v661 = vpack.c.b16 %v493, %v491
    %v662 = vpack.c.b16 %v494, %v492
    %v663 = vpack.c.b16 %v497, %v495
    %v664 = vpack.c.b16 %v498, %v496
    %v665 = vpack.c.b16 %v501, %v499
    %v666 = vpack.c.b16 %v502, %v500
    %v667 = vpack.c.b16 %v505, %v503
    %v668 = vpack.c.b16 %v506, %v504
    %v669 = vpack.c.b16 %v509, %v507
    %v670 = vpack.c.b16 %v510, %v508
    %v671 = vpack.c.b16 %v513, %v511
    %v672 = vpack.c.b16 %v514, %v512
    %v673 = vpack.c.b16 %v517, %v515
    %v674 = vpack.c.b16 %v518, %v516
    %v675 = vpack.c.b16 %v521, %v519
    %v676 = vpack.c.b16 %v522, %v520
    %v677 = vpack.c.b16 %v525, %v523
    %v678 = vpack.c.b16 %v526, %v524
    %v679 = vpack.c.b16 %v529, %v527
    %v680 = vpack.c.b16 %v530, %v528
    %v681 = vpack.c.b16 %v533, %v531
    %v682 = vpack.c.b16 %v534, %v532
    %v683 = vpack.c.b16 %v537, %v535
    %v684 = vpack.c.b16 %v538, %v536
    %v685 = vpack.c.b16 %v541, %v539
    %v686 = vpack.c.b16 %v542, %v540
    %v687 = vpack.c.b16 %v545, %v543
    %v688 = vpack.c.b16 %v546, %v544
    %v689 = vpack.c.b16 %v549, %v547
    %v690 = vpack.c.b16 %v550, %v548
    %v691 = vpack.c.b16 %v553, %v551
    %v692 = vpack.c.b16 %v554, %v552
    %v693 = vpack.c.b16 %v557, %v555
    %v694 = vpack.c.b16 %v558, %v556
    %v695 = vpack.c.b16 %v561, %v559
    %v696 = vpack.c.b16 %v562, %v560
    %v697 = vpack.c.b16 %v565, %v563
    %v698 = vpack.c.b16 %v566, %v564
    %v699 = vpack.c.b16 %v569, %v567
    %v700 = vpack.c.b16 %v570, %v568
    %v701 = vpack.c.b16 %v573, %v571
    %v702 = vpack.c.b16 %v574, %v572
    %v703 = vpack.c.b16 %v577, %v575
    %v704 = vpack.c.b16 %v578, %v576
    %v705 = vpack.c.b16 %v581, %v579
    %v706 = vpack.c.b16 %v582, %v580
    %v707 = vpack.c.b16 %v585, %v583
    %v708 = vpack.c.b16 %v586, %v584
    %v709 = vpack.c.b16 %v589, %v587
    %v710 = vpack.c.b16 %v590, %v588
    %v711 = vpack.c.b16 %v593, %v591
    %v712 = vpack.c.b16 %v594, %v592
    %v713 = vpack.c.b16 %v597, %v595
    %v714 = vpack.c.b16 %v598, %v596
    %v715 = vpack.c.b16 %v601, %v599
    %v716 = vpack.c.b16 %v602, %v600
    %v717 = vpack.c.b16 %v605, %v603
    %v718 = vpack.c.b16 %v606, %v604
    %831 = vmatprep.subr.bf16.mxu0 %v608
    %832 = vmatpush1.bf16.msra.mxu0 %v607
    %833 = vmatprep.subr.bf16.mxu0 %v610
    %834 = vmatpush1.bf16.msra.mxu0 %v609
    %835 = vmatprep.subr.bf16.mxu0 %v612
    %836 = vmatpush1.bf16.msra.mxu0 %v611
    %837 = vmatprep.subr.bf16.mxu0 %v614
    %838 = vmatpush1.bf16.msra.mxu0 %v613
    %839 = vmatprep.subr.bf16.mxu0 %v616
    %840 = vmatpush1.bf16.msra.mxu0 %v615
    %841 = vmatprep.subr.bf16.mxu0 %v618
    %842 = vmatpush1.bf16.msra.mxu0 %v617
    %843 = vmatprep.subr.bf16.mxu0 %v620
    %844 = vmatpush1.bf16.msra.mxu0 %v619
    %845 = vmatprep.subr.bf16.mxu0 %v622
    %846 = vmatpush1.bf16.msra.mxu0 %v621
    %847 = vmatprep.subr.bf16.mxu0 %v624
    %848 = vmatpush1.bf16.msra.mxu0 %v623
    %849 = vmatprep.subr.bf16.mxu0 %v626
    %850 = vmatpush1.bf16.msra.mxu0 %v625
    %851 = vmatprep.subr.bf16.mxu0 %v628
    %852 = vmatpush1.bf16.msra.mxu0 %v627
    %853 = vmatprep.subr.bf16.mxu0 %v630
    %854 = vmatpush1.bf16.msra.mxu0 %v629
    %855 = vmatprep.subr.bf16.mxu0 %v632
    %856 = vmatpush1.bf16.msra.mxu0 %v631
    %857 = vmatprep.subr.bf16.mxu0 %v634
    %858 = vmatpush1.bf16.msra.mxu0 %v633
    %859 = vmatprep.subr.bf16.mxu0 %v636
    %860 = vmatpush1.bf16.msra.mxu0 %v635
    %861 = vmatprep.subr.bf16.mxu0 %v638
    %862 = vmatpush1.bf16.msra.mxu0 %v637
    %863 = vmatprep.mubr.bf16.mxu0 %v258
    %864 = vmatmul.mubr.bf16.gmra.mrb[0].mxu0 %v257
    %v865 = vpop.f32.mrb[0].mxu0
    %v866 = vadd.f32 %v239, %v865
    %v867 = vpop.f32.mrb[0].mxu0
    %v868 = vadd.f32 %v243, %v867
    %v869 = vpop.f32.mrb[0].mxu0
    %v870 = vpop.f32.mrb[0].mxu0
    %871 = vdwg.mxu0
    %872 = vmatprep.subr.bf16.mxu0 %v640
    %873 = vmatpush1.bf16.msra.mxu0 %v639
    %874 = vmatprep.subr.bf16.mxu0 %v642
    %875 = vmatpush1.bf16.msra.mxu0 %v641
    %876 = vmatprep.subr.bf16.mxu0 %v644
    %877 = vmatpush1.bf16.msra.mxu0 %v643
    %878 = vmatprep.subr.bf16.mxu0 %v646
    %879 = vmatpush1.bf16.msra.mxu0 %v645
    %880 = vmatprep.subr.bf16.mxu0 %v648
    %881 = vmatpush1.bf16.msra.mxu0 %v647
    %882 = vmatprep.subr.bf16.mxu0 %v650
    %883 = vmatpush1.bf16.msra.mxu0 %v649
    %884 = vmatprep.subr.bf16.mxu0 %v652
    %885 = vmatpush1.bf16.msra.mxu0 %v651
    %886 = vmatprep.subr.bf16.mxu0 %v654
    %887 = vmatpush1.bf16.msra.mxu0 %v653
    %888 = vmatprep.subr.bf16.mxu0 %v656
    %889 = vmatpush1.bf16.msra.mxu0 %v655
    %890 = vmatprep.subr.bf16.mxu0 %v658
    %891 = vmatpush1.bf16.msra.mxu0 %v657
    %892 = vmatprep.subr.bf16.mxu0 %v660
    %893 = vmatpush1.bf16.msra.mxu0 %v659
    %894 = vmatprep.subr.bf16.mxu0 %v662
    %895 = vmatpush1.bf16.msra.mxu0 %v661
    %896 = vmatprep.subr.bf16.mxu0 %v664
    %897 = vmatpush1.bf16.msra.mxu0 %v663
    %898 = vmatprep.subr.bf16.mxu0 %v666
    %899 = vmatpush1.bf16.msra.mxu0 %v665
    %900 = vmatprep.subr.bf16.mxu0 %v668
    %901 = vmatpush1.bf16.msra.mxu0 %v667
    %902 = vmatprep.subr.bf16.mxu0 %v670
    %903 = vmatpush1.bf16.msra.mxu0 %v669
    %904 = vmatprep.mubr.bf16.mxu0 %v260
    %905 = vmatmul.mubr.bf16.gmra.mrb[0].mxu0 %v259
    %v906 = vpop.f32.mrb[0].mxu0
    %v907 = vadd.f32 %v866, %v906
    %v908 = vpop.f32.mrb[0].mxu0
    %v909 = vadd.f32 %v868, %v908
    %v910 = vpop.f32.mrb[0].mxu0
    %v911 = vpop.f32.mrb[0].mxu0
    %912 = vdwg.mxu0
    %913 = vmatprep.subr.bf16.mxu0 %v672
    %914 = vmatpush1.bf16.msra.mxu0 %v671
    %915 = vmatprep.subr.bf16.mxu0 %v674
    %916 = vmatpush1.bf16.msra.mxu0 %v673
    %917 = vmatprep.subr.bf16.mxu0 %v676
    %918 = vmatpush1.bf16.msra.mxu0 %v675
    %919 = vmatprep.subr.bf16.mxu0 %v678
    %920 = vmatpush1.bf16.msra.mxu0 %v677
    %921 = vmatprep.subr.bf16.mxu0 %v680
    %922 = vmatpush1.bf16.msra.mxu0 %v679
    %923 = vmatprep.subr.bf16.mxu0 %v682
    %924 = vmatpush1.bf16.msra.mxu0 %v681
    %925 = vmatprep.subr.bf16.mxu0 %v684
    %926 = vmatpush1.bf16.msra.mxu0 %v683
    %927 = vmatprep.subr.bf16.mxu0 %v686
    %928 = vmatpush1.bf16.msra.mxu0 %v685
    %929 = vmatprep.subr.bf16.mxu0 %v688
    %930 = vmatpush1.bf16.msra.mxu0 %v687
    %931 = vmatprep.subr.bf16.mxu0 %v690
    %932 = vmatpush1.bf16.msra.mxu0 %v689
    %933 = vmatprep.subr.bf16.mxu0 %v692
    %934 = vmatpush1.bf16.msra.mxu0 %v691
    %935 = vmatprep.subr.bf16.mxu0 %v694
    %936 = vmatpush1.bf16.msra.mxu0 %v693
    %937 = vmatprep.subr.bf16.mxu0 %v696
    %938 = vmatpush1.bf16.msra.mxu0 %v695
    %939 = vmatprep.subr.bf16.mxu0 %v698
    %940 = vmatpush1.bf16.msra.mxu0 %v697
    %941 = vmatprep.subr.bf16.mxu0 %v700
    %942 = vmatpush1.bf16.msra.mxu0 %v699
    %943 = vmatprep.subr.bf16.mxu0 %v702
    %944 = vmatpush1.bf16.msra.mxu0 %v701
    %945 = vmatprep.mubr.bf16.mxu0 %v262
    %946 = vmatmul.mubr.bf16.gmra.mrb[0].mxu0 %v261
    %v947 = vpop.f32.mrb[0].mxu0
    %v948 = vadd.f32 %v907, %v947
    %v949 = vpop.f32.mrb[0].mxu0
    %v950 = vadd.f32 %v909, %v949
    %v951 = vpop.f32.mrb[0].mxu0
    %v952 = vpop.f32.mrb[0].mxu0
    %953 = vdwg.mxu0
    %954 = vmatprep.subr.bf16.mxu0 %v704
    %955 = vmatpush1.bf16.msra.mxu0 %v703
    %956 = vmatprep.subr.bf16.mxu0 %v706
    %957 = vmatpush1.bf16.msra.mxu0 %v705
    %958 = vmatprep.subr.bf16.mxu0 %v708
    %959 = vmatpush1.bf16.msra.mxu0 %v707
    %960 = vmatprep.subr.bf16.mxu0 %v710
    %961 = vmatpush1.bf16.msra.mxu0 %v709
    %962 = vmatprep.subr.bf16.mxu0 %v712
    %963 = vmatpush1.bf16.msra.mxu0 %v711
    %964 = vmatprep.subr.bf16.mxu0 %v714
    %965 = vmatpush1.bf16.msra.mxu0 %v713
    %966 = vmatprep.subr.bf16.mxu0 %v716
    %967 = vmatpush1.bf16.msra.mxu0 %v715
    %968 = vmatprep.subr.bf16.mxu0 %v718
    %969 = vmatpush1.bf16.msra.mxu0 %v717
    %970 = vmatprep.subr.bf16.mxu0 0
    %971 = vmatpush1.bf16.msra.mxu0 0
    %972 = vmatprep.subr.bf16.mxu0 0
    %973 = vmatpush1.bf16.msra.mxu0 0
    %974 = vmatprep.subr.bf16.mxu0 0
    %975 = vmatpush1.bf16.msra.mxu0 0
    %976 = vmatprep.subr.bf16.mxu0 0
    %977 = vmatpush1.bf16.msra.mxu0 0
    %978 = vmatprep.subr.bf16.mxu0 0
    %979 = vmatpush1.bf16.msra.mxu0 0
    %980 = vmatprep.subr.bf16.mxu0 0
    %981 = vmatpush1.bf16.msra.mxu0 0
    %982 = vmatprep.subr.bf16.mxu0 0
    %983 = vmatpush1.bf16.msra.mxu0 0
    %984 = vmatprep.subr.bf16.mxu0 0
    %985 = vmatpush1.bf16.msra.mxu0 0
    %986 = vmatprep.mubr.bf16.mxu0 0
    %987 = vmatmul.mubr.bf16.gmra.mrb[0].mxu0 %v263
    %v988 = vpop.f32.mrb[0].mxu0
    %v989 = vadd.f32 %v948, %v988
    %v990 = vpop.f32.mrb[0].mxu0
    %v991 = vadd.f32 %v950, %v990
    %v992 = vpop.f32.mrb[0].mxu0
    %v993 = vpop.f32.mrb[0].mxu0
    %994 = vdwg.mxu0
    %v995 = vld [vmem:[%s3] sm:$0x3]
    %v996 = vld [vmem:[%s4] sm:$0x3]
    %v997 = vmax.f32 %v989, 0.0
    %v998 = vmax.f32 %v991, 0.0
    %v999 = vadd.f32 %v997, %v998
    %1000 = vadd.xlane.f32.xlu0 %v999
    %v1001 = vpop.xlane.xlu0 %1000
    %v1002 = vmul.f32 %v997, %v997
    %v1003 = vmul.f32 %v998, %v998
    %v1004 = vadd.f32 %v1002, %v1003
    %1005 = vadd.xlane.f32.xlu0 %v1004
    %v1006 = vpop.xlane.xlu0 %1005
    %v1007 = vmul.f32 %v1001, 0.00390625
    %v1008 = vmul.f32 %v1006, 0.00390625
    %v1009 = vmul.f32 %v1007, %v1007
    %v1010 = vsub.f32 %v1008, %v1009
    %v1011 = vsub.f32 %v997, %v1007
    %v1012 = vsub.f32 %v998, %v1007
    %v1013 = vadd.f32 %v1010, 1e-05
    %v1014 = vrsqrt.pop %v1013
    %v1015 = vmul.f32 %v1011, %v1014
    %v1016 = vmul.f32 %v1012, %v1014
    %v1018 = vlaneseq
    %v1019 = vshrl.u32 %v1018, 7
    %v1020 = vsub.s32 0, %v1019
    %v1021 = vrot.slane %v995, %v1020
    %v1022 = vlaneseq
    %v1023 = vshrl.u32 %v1022, 7
    %v1024 = vsub.s32 1, %v1023
    %v1025 = vrot.slane %v995, %v1024
    %v1028 = vmul.f32 %v1015, %v1021
    %v1029 = vmul.f32 %v1016, %v1025
    %v1031 = vlaneseq
    %v1032 = vshrl.u32 %v1031, 7
    %v1033 = vsub.s32 0, %v1032
    %v1034 = vrot.slane %v996, %v1033
    %v1035 = vlaneseq
    %v1036 = vshrl.u32 %v1035, 7
    %v1037 = vsub.s32 1, %v1036
    %v1038 = vrot.slane %v996, %v1037
    %v1041 = vadd.f32 %v1028, %v1034
    %v1042 = vadd.f32 %v1029, %v1038
    %v1043 = vpack.c.bf16 %v1041, %v1041
    %v1044 = vpack.c.bf16 %v1042, %v1042
    %v1045 = vld [vmem:[#allocation7] sm:$0xff]
    %v1046 = vld [vmem:[#allocation7 + $0x8] sm:$0xff]
    %v1047 = vld [vmem:[#allocation7 + $0x10] sm:$0xff]
    %v1048 = vld [vmem:[#allocation7 + $0x18] sm:$0xff]
    %v1049 = vld [vmem:[#allocation7 + $0x20] sm:$0xff]
    %v1050 = vld [vmem:[#allocation7 + $0x28] sm:$0xff]
    %v1051 = vld [vmem:[#allocation7 + $0x30] sm:$0xff]
    %v1052 = vld [vmem:[#allocation7 + $0x38] sm:$0xff]
    %v1053 = vld [vmem:[#allocation7 + $0x40] sm:$0xff]
    %v1054 = vld [vmem:[#allocation7 + $0x48] sm:$0xff]
    %v1055 = vld [vmem:[#allocation7 + $0x50] sm:$0xff]
    %v1056 = vld [vmem:[#allocation7 + $0x58] sm:$0xff]
    %v1057 = vld [vmem:[#allocation7 + $0x60] sm:$0xff]
    %v1058 = vld [vmem:[#allocation7 + $0x68] sm:$0xff]
    %v1059 = vld [vmem:[#allocation7 + $0x70] sm:$0xff]
    %v1060 = vld [vmem:[#allocation7 + $0x78] sm:$0xff]
    %v1061 = vld [vmem:[#allocation7 + $0x80] sm:$0xff]
    %v1062 = vld [vmem:[#allocation7 + $0x88] sm:$0xff]
    %v1063 = vld [vmem:[#allocation7 + $0x90] sm:$0xff]
    %v1064 = vld [vmem:[#allocation7 + $0x98] sm:$0xff]
    %v1065 = vld [vmem:[#allocation7 + $0xa0] sm:$0xff]
    %v1066 = vld [vmem:[#allocation7 + $0xa8] sm:$0xff]
    %v1067 = vld [vmem:[#allocation7 + $0xb0] sm:$0xff]
    %v1068 = vld [vmem:[#allocation7 + $0xb8] sm:$0xff]
    %v1069 = vld [vmem:[#allocation7 + $0xc0] sm:$0xff]
    %v1070 = vld [vmem:[#allocation7 + $0xc8] sm:$0xff]
    %v1071 = vld [vmem:[#allocation7 + $0xd0] sm:$0xff]
    %v1072 = vld [vmem:[#allocation7 + $0xd8] sm:$0xff]
    %v1073 = vld [vmem:[#allocation7 + $0xe0] sm:$0xff]
    %v1074 = vld [vmem:[#allocation7 + $0xe8] sm:$0xff]
    %v1075 = vld [vmem:[#allocation7 + $0xf0] sm:$0xff]
    %v1076 = vld [vmem:[#allocation7 + $0xf8] sm:$0xff]
    %v1077 = vld [vmem:[%s6] sm:$0x3]
    %v1079 = vlaneseq
    %v1080 = vshrl.u32 %v1079, 7
    %v1081 = vsub.s32 0, %v1080
    %v1082 = vrot.slane %v1077, %v1081
    %v1083 = vlaneseq
    %v1084 = vshrl.u32 %v1083, 7
    %v1085 = vsub.s32 1, %v1084
    %v1086 = vrot.slane %v1077, %v1085
    %v1121 = vunpack.c.l.b16 %v1045
    %v1122 = vunpack.c.h.b16 %v1045
    %v1123 = vunpack.c.l.b16 %v1046
    %v1124 = vunpack.c.h.b16 %v1046
    %v1125 = vunpack.c.l.b16 %v1047
    %v1126 = vunpack.c.h.b16 %v1047
    %v1127 = vunpack.c.l.b16 %v1048
    %v1128 = vunpack.c.h.b16 %v1048
    %v1129 = vunpack.c.l.b16 %v1049
    %v1130 = vunpack.c.h.b16 %v1049
    %v1131 = vunpack.c.l.b16 %v1050
    %v1132 = vunpack.c.h.b16 %v1050
    %v1133 = vunpack.c.l.b16 %v1051
    %v1134 = vunpack.c.h.b16 %v1051
    %v1135 = vunpack.c.l.b16 %v1052
    %v1136 = vunpack.c.h.b16 %v1052
    %v1137 = vunpack.c.l.b16 %v1053
    %v1138 = vunpack.c.h.b16 %v1053
    %v1139 = vunpack.c.l.b16 %v1054
    %v1140 = vunpack.c.h.b16 %v1054
    %v1141 = vunpack.c.l.b16 %v1055
    %v1142 = vunpack.c.h.b16 %v1055
    %v1143 = vunpack.c.l.b16 %v1056
    %v1144 = vunpack.c.h.b16 %v1056
    %v1145 = vunpack.c.l.b16 %v1057
    %v1146 = vunpack.c.h.b16 %v1057
    %v1147 = vunpack.c.l.b16 %v1058
    %v1148 = vunpack.c.h.b16 %v1058
    %v1149 = vunpack.c.l.b16 %v1059
    %v1150 = vunpack.c.h.b16 %v1059
    %v1151 = vunpack.c.l.b16 %v1060
    %v1152 = vunpack.c.h.b16 %v1060
    %v1153 = vunpack.c.l.b16 %v1061
    %v1154 = vunpack.c.h.b16 %v1061
    %v1155 = vunpack.c.l.b16 %v1062
    %v1156 = vunpack.c.h.b16 %v1062
    %v1157 = vunpack.c.l.b16 %v1063
    %v1158 = vunpack.c.h.b16 %v1063
    %v1159 = vunpack.c.l.b16 %v1064
    %v1160 = vunpack.c.h.b16 %v1064
    %v1161 = vunpack.c.l.b16 %v1065
    %v1162 = vunpack.c.h.b16 %v1065
    %v1163 = vunpack.c.l.b16 %v1066
    %v1164 = vunpack.c.h.b16 %v1066
    %v1165 = vunpack.c.l.b16 %v1067
    %v1166 = vunpack.c.h.b16 %v1067
    %v1167 = vunpack.c.l.b16 %v1068
    %v1168 = vunpack.c.h.b16 %v1068
    %v1169 = vunpack.c.l.b16 %v1069
    %v1170 = vunpack.c.h.b16 %v1069
    %v1171 = vunpack.c.l.b16 %v1070
    %v1172 = vunpack.c.h.b16 %v1070
    %v1173 = vunpack.c.l.b16 %v1071
    %v1174 = vunpack.c.h.b16 %v1071
    %v1175 = vunpack.c.l.b16 %v1072
    %v1176 = vunpack.c.h.b16 %v1072
    %v1177 = vunpack.c.l.b16 %v1073
    %v1178 = vunpack.c.h.b16 %v1073
    %v1179 = vunpack.c.l.b16 %v1074
    %v1180 = vunpack.c.h.b16 %v1074
    %v1181 = vunpack.c.l.b16 %v1075
    %v1182 = vunpack.c.h.b16 %v1075
    %v1183 = vunpack.c.l.b16 %v1076
    %v1184 = vunpack.c.h.b16 %v1076
    %v1185 = vpack.c.b16 %v1123, %v1121
    %v1186 = vpack.c.b16 %v1124, %v1122
    %v1187 = vpack.c.b16 %v1127, %v1125
    %v1188 = vpack.c.b16 %v1128, %v1126
    %v1189 = vpack.c.b16 %v1131, %v1129
    %v1190 = vpack.c.b16 %v1132, %v1130
    %v1191 = vpack.c.b16 %v1135, %v1133
    %v1192 = vpack.c.b16 %v1136, %v1134
    %v1193 = vpack.c.b16 %v1139, %v1137
    %v1194 = vpack.c.b16 %v1140, %v1138
    %v1195 = vpack.c.b16 %v1143, %v1141
    %v1196 = vpack.c.b16 %v1144, %v1142
    %v1197 = vpack.c.b16 %v1147, %v1145
    %v1198 = vpack.c.b16 %v1148, %v1146
    %v1199 = vpack.c.b16 %v1151, %v1149
    %v1200 = vpack.c.b16 %v1152, %v1150
    %v1201 = vpack.c.b16 %v1155, %v1153
    %v1202 = vpack.c.b16 %v1156, %v1154
    %v1203 = vpack.c.b16 %v1159, %v1157
    %v1204 = vpack.c.b16 %v1160, %v1158
    %v1205 = vpack.c.b16 %v1163, %v1161
    %v1206 = vpack.c.b16 %v1164, %v1162
    %v1207 = vpack.c.b16 %v1167, %v1165
    %v1208 = vpack.c.b16 %v1168, %v1166
    %v1209 = vpack.c.b16 %v1171, %v1169
    %v1210 = vpack.c.b16 %v1172, %v1170
    %v1211 = vpack.c.b16 %v1175, %v1173
    %v1212 = vpack.c.b16 %v1176, %v1174
    %v1213 = vpack.c.b16 %v1179, %v1177
    %v1214 = vpack.c.b16 %v1180, %v1178
    %v1215 = vpack.c.b16 %v1183, %v1181
    %v1216 = vpack.c.b16 %v1184, %v1182
    %1249 = vmatprep.subr.bf16.mxu0 %v1186
    %1250 = vmatpush1.bf16.msra.mxu0 %v1185
    %1251 = vmatprep.subr.bf16.mxu0 %v1188
    %1252 = vmatpush1.bf16.msra.mxu0 %v1187
    %1253 = vmatprep.subr.bf16.mxu0 %v1190
    %1254 = vmatpush1.bf16.msra.mxu0 %v1189
    %1255 = vmatprep.subr.bf16.mxu0 %v1192
    %1256 = vmatpush1.bf16.msra.mxu0 %v1191
    %1257 = vmatprep.subr.bf16.mxu0 %v1194
    %1258 = vmatpush1.bf16.msra.mxu0 %v1193
    %1259 = vmatprep.subr.bf16.mxu0 %v1196
    %1260 = vmatpush1.bf16.msra.mxu0 %v1195
    %1261 = vmatprep.subr.bf16.mxu0 %v1198
    %1262 = vmatpush1.bf16.msra.mxu0 %v1197
    %1263 = vmatprep.subr.bf16.mxu0 %v1200
    %1264 = vmatpush1.bf16.msra.mxu0 %v1199
    %1265 = vmatprep.subr.bf16.mxu0 %v1202
    %1266 = vmatpush1.bf16.msra.mxu0 %v1201
    %1267 = vmatprep.subr.bf16.mxu0 %v1204
    %1268 = vmatpush1.bf16.msra.mxu0 %v1203
    %1269 = vmatprep.subr.bf16.mxu0 %v1206
    %1270 = vmatpush1.bf16.msra.mxu0 %v1205
    %1271 = vmatprep.subr.bf16.mxu0 %v1208
    %1272 = vmatpush1.bf16.msra.mxu0 %v1207
    %1273 = vmatprep.subr.bf16.mxu0 %v1210
    %1274 = vmatpush1.bf16.msra.mxu0 %v1209
    %1275 = vmatprep.subr.bf16.mxu0 %v1212
    %1276 = vmatpush1.bf16.msra.mxu0 %v1211
    %1277 = vmatprep.subr.bf16.mxu0 %v1214
    %1278 = vmatpush1.bf16.msra.mxu0 %v1213
    %1279 = vmatprep.subr.bf16.mxu0 %v1216
    %1280 = vmatpush1.bf16.msra.mxu0 %v1215
    %1281 = vmatprep.mubr.bf16.mxu0 %v1044
    %1282 = vmatmul.mubr.bf16.gmra.mrb[0].mxu0 %v1043
    %v1283 = vpop.f32.mrb[0].mxu0
    %v1284 = vadd.f32 %v1082, %v1283
    %v1285 = vpop.f32.mrb[0].mxu0
    %v1286 = vadd.f32 %v1086, %v1285
    %v1287 = vpop.f32.mrb[0].mxu0
    %v1288 = vpop.f32.mrb[0].mxu0
    %1289 = vdwg.mxu0
    %v1290 = vld [vmem:[%s7] sm:$0x3]
    %v1291 = vld [vmem:[%s8] sm:$0x3]
    %v1292 = vmax.f32 %v1284, 0.0
    %v1293 = vmax.f32 %v1286, 0.0
    %v1294 = vadd.f32 %v1292, %v1293
    %1295 = vadd.xlane.f32.xlu0 %v1294
    %v1296 = vpop.xlane.xlu0 %1295
    %v1297 = vmul.f32 %v1292, %v1292
    %v1298 = vmul.f32 %v1293, %v1293
    %v1299 = vadd.f32 %v1297, %v1298
    %1300 = vadd.xlane.f32.xlu0 %v1299
    %v1301 = vpop.xlane.xlu0 %1300
    %v1302 = vmul.f32 %v1296, 0.00390625
    %v1303 = vmul.f32 %v1301, 0.00390625
    %v1304 = vmul.f32 %v1302, %v1302
    %v1305 = vsub.f32 %v1303, %v1304
    %v1306 = vsub.f32 %v1292, %v1302
    %v1307 = vsub.f32 %v1293, %v1302
    %v1308 = vadd.f32 %v1305, 1e-05
    %v1309 = vrsqrt.pop %v1308
    %v1310 = vmul.f32 %v1306, %v1309
    %v1311 = vmul.f32 %v1307, %v1309
    %v1313 = vlaneseq
    %v1314 = vshrl.u32 %v1313, 7
    %v1315 = vsub.s32 0, %v1314
    %v1316 = vrot.slane %v1290, %v1315
    %v1317 = vlaneseq
    %v1318 = vshrl.u32 %v1317, 7
    %v1319 = vsub.s32 1, %v1318
    %v1320 = vrot.slane %v1290, %v1319
    %v1323 = vmul.f32 %v1310, %v1316
    %v1324 = vmul.f32 %v1311, %v1320
    %v1326 = vlaneseq
    %v1327 = vshrl.u32 %v1326, 7
    %v1328 = vsub.s32 0, %v1327
    %v1329 = vrot.slane %v1291, %v1328
    %v1330 = vlaneseq
    %v1331 = vshrl.u32 %v1330, 7
    %v1332 = vsub.s32 1, %v1331
    %v1333 = vrot.slane %v1291, %v1332
    %v1336 = vadd.f32 %v1323, %v1329
    %v1337 = vadd.f32 %v1324, %v1333
    %v1338 = vpack.c.bf16 %v1336, %v1336
    %v1339 = vpack.c.bf16 %v1337, %v1337
    %v1340 = vld [vmem:[#allocation8] sm:$0xff]
    %v1341 = vld [vmem:[#allocation8 + $0x8] sm:$0xff]
    %v1342 = vld [vmem:[#allocation8 + $0x10] sm:$0xff]
    %v1343 = vld [vmem:[#allocation8 + $0x18] sm:$0xff]
    %v1344 = vld [vmem:[#allocation8 + $0x20] sm:$0xff]
    %v1345 = vld [vmem:[#allocation8 + $0x28] sm:$0xff]
    %v1346 = vld [vmem:[#allocation8 + $0x30] sm:$0xff]
    %v1347 = vld [vmem:[#allocation8 + $0x38] sm:$0xff]
    %v1348 = vld [vmem:[#allocation8 + $0x40] sm:$0xff]
    %v1349 = vld [vmem:[#allocation8 + $0x48] sm:$0xff]
    %v1350 = vld [vmem:[#allocation8 + $0x50] sm:$0xff]
    %v1351 = vld [vmem:[#allocation8 + $0x58] sm:$0xff]
    %v1352 = vld [vmem:[#allocation8 + $0x60] sm:$0xff]
    %v1353 = vld [vmem:[#allocation8 + $0x68] sm:$0xff]
    %v1354 = vld [vmem:[#allocation8 + $0x70] sm:$0xff]
    %v1355 = vld [vmem:[#allocation8 + $0x78] sm:$0xff]
    %v1356 = vld [vmem:[#allocation8 + $0x80] sm:$0xff]
    %v1357 = vld [vmem:[#allocation8 + $0x88] sm:$0xff]
    %v1358 = vld [vmem:[#allocation8 + $0x90] sm:$0xff]
    %v1359 = vld [vmem:[#allocation8 + $0x98] sm:$0xff]
    %v1360 = vld [vmem:[#allocation8 + $0xa0] sm:$0xff]
    %v1361 = vld [vmem:[#allocation8 + $0xa8] sm:$0xff]
    %v1362 = vld [vmem:[#allocation8 + $0xb0] sm:$0xff]
    %v1363 = vld [vmem:[#allocation8 + $0xb8] sm:$0xff]
    %v1364 = vld [vmem:[#allocation8 + $0xc0] sm:$0xff]
    %v1365 = vld [vmem:[#allocation8 + $0xc8] sm:$0xff]
    %v1366 = vld [vmem:[#allocation8 + $0xd0] sm:$0xff]
    %v1367 = vld [vmem:[#allocation8 + $0xd8] sm:$0xff]
    %v1368 = vld [vmem:[#allocation8 + $0xe0] sm:$0xff]
    %v1369 = vld [vmem:[#allocation8 + $0xe8] sm:$0xff]
    %v1370 = vld [vmem:[#allocation8 + $0xf0] sm:$0xff]
    %v1371 = vld [vmem:[#allocation8 + $0xf8] sm:$0xff]
    %v1372 = vld [vmem:[%s10] sm:$0x3]
    %v1374 = vlaneseq
    %v1375 = vshrl.u32 %v1374, 7
    %v1376 = vsub.s32 0, %v1375
    %v1377 = vrot.slane %v1372, %v1376
    %v1378 = vlaneseq
    %v1379 = vshrl.u32 %v1378, 7
    %v1380 = vsub.s32 1, %v1379
    %v1381 = vrot.slane %v1372, %v1380
    %v1416 = vunpack.c.l.b16 %v1340
    %v1417 = vunpack.c.h.b16 %v1340
    %v1418 = vunpack.c.l.b16 %v1341
    %v1419 = vunpack.c.h.b16 %v1341
    %v1420 = vunpack.c.l.b16 %v1342
    %v1421 = vunpack.c.h.b16 %v1342
    %v1422 = vunpack.c.l.b16 %v1343
    %v1423 = vunpack.c.h.b16 %v1343
    %v1424 = vunpack.c.l.b16 %v1344
    %v1425 = vunpack.c.h.b16 %v1344
    %v1426 = vunpack.c.l.b16 %v1345
    %v1427 = vunpack.c.h.b16 %v1345
    %v1428 = vunpack.c.l.b16 %v1346
    %v1429 = vunpack.c.h.b16 %v1346
    %v1430 = vunpack.c.l.b16 %v1347
    %v1431 = vunpack.c.h.b16 %v1347
    %v1432 = vunpack.c.l.b16 %v1348
    %v1433 = vunpack.c.h.b16 %v1348
    %v1434 = vunpack.c.l.b16 %v1349
    %v1435 = vunpack.c.h.b16 %v1349
    %v1436 = vunpack.c.l.b16 %v1350
    %v1437 = vunpack.c.h.b16 %v1350
    %v1438 = vunpack.c.l.b16 %v1351
    %v1439 = vunpack.c.h.b16 %v1351
    %v1440 = vunpack.c.l.b16 %v1352
    %v1441 = vunpack.c.h.b16 %v1352
    %v1442 = vunpack.c.l.b16 %v1353
    %v1443 = vunpack.c.h.b16 %v1353
    %v1444 = vunpack.c.l.b16 %v1354
    %v1445 = vunpack.c.h.b16 %v1354
    %v1446 = vunpack.c.l.b16 %v1355
    %v1447 = vunpack.c.h.b16 %v1355
    %v1448 = vunpack.c.l.b16 %v1356
    %v1449 = vunpack.c.h.b16 %v1356
    %v1450 = vunpack.c.l.b16 %v1357
    %v1451 = vunpack.c.h.b16 %v1357
    %v1452 = vunpack.c.l.b16 %v1358
    %v1453 = vunpack.c.h.b16 %v1358
    %v1454 = vunpack.c.l.b16 %v1359
    %v1455 = vunpack.c.h.b16 %v1359
    %v1456 = vunpack.c.l.b16 %v1360
    %v1457 = vunpack.c.h.b16 %v1360
    %v1458 = vunpack.c.l.b16 %v1361
    %v1459 = vunpack.c.h.b16 %v1361
    %v1460 = vunpack.c.l.b16 %v1362
    %v1461 = vunpack.c.h.b16 %v1362
    %v1462 = vunpack.c.l.b16 %v1363
    %v1463 = vunpack.c.h.b16 %v1363
    %v1464 = vunpack.c.l.b16 %v1364
    %v1465 = vunpack.c.h.b16 %v1364
    %v1466 = vunpack.c.l.b16 %v1365
    %v1467 = vunpack.c.h.b16 %v1365
    %v1468 = vunpack.c.l.b16 %v1366
    %v1469 = vunpack.c.h.b16 %v1366
    %v1470 = vunpack.c.l.b16 %v1367
    %v1471 = vunpack.c.h.b16 %v1367
    %v1472 = vunpack.c.l.b16 %v1368
    %v1473 = vunpack.c.h.b16 %v1368
    %v1474 = vunpack.c.l.b16 %v1369
    %v1475 = vunpack.c.h.b16 %v1369
    %v1476 = vunpack.c.l.b16 %v1370
    %v1477 = vunpack.c.h.b16 %v1370
    %v1478 = vunpack.c.l.b16 %v1371
    %v1479 = vunpack.c.h.b16 %v1371
    %v1480 = vpack.c.b16 %v1418, %v1416
    %v1481 = vpack.c.b16 %v1419, %v1417
    %v1482 = vpack.c.b16 %v1422, %v1420
    %v1483 = vpack.c.b16 %v1423, %v1421
    %v1484 = vpack.c.b16 %v1426, %v1424
    %v1485 = vpack.c.b16 %v1427, %v1425
    %v1486 = vpack.c.b16 %v1430, %v1428
    %v1487 = vpack.c.b16 %v1431, %v1429
    %v1488 = vpack.c.b16 %v1434, %v1432
    %v1489 = vpack.c.b16 %v1435, %v1433
    %v1490 = vpack.c.b16 %v1438, %v1436
    %v1491 = vpack.c.b16 %v1439, %v1437
    %v1492 = vpack.c.b16 %v1442, %v1440
    %v1493 = vpack.c.b16 %v1443, %v1441
    %v1494 = vpack.c.b16 %v1446, %v1444
    %v1495 = vpack.c.b16 %v1447, %v1445
    %v1496 = vpack.c.b16 %v1450, %v1448
    %v1497 = vpack.c.b16 %v1451, %v1449
    %v1498 = vpack.c.b16 %v1454, %v1452
    %v1499 = vpack.c.b16 %v1455, %v1453
    %v1500 = vpack.c.b16 %v1458, %v1456
    %v1501 = vpack.c.b16 %v1459, %v1457
    %v1502 = vpack.c.b16 %v1462, %v1460
    %v1503 = vpack.c.b16 %v1463, %v1461
    %v1504 = vpack.c.b16 %v1466, %v1464
    %v1505 = vpack.c.b16 %v1467, %v1465
    %v1506 = vpack.c.b16 %v1470, %v1468
    %v1507 = vpack.c.b16 %v1471, %v1469
    %v1508 = vpack.c.b16 %v1474, %v1472
    %v1509 = vpack.c.b16 %v1475, %v1473
    %v1510 = vpack.c.b16 %v1478, %v1476
    %v1511 = vpack.c.b16 %v1479, %v1477
    %1544 = vmatprep.subr.bf16.mxu0 %v1481
    %1545 = vmatpush1.bf16.msra.mxu0 %v1480
    %1546 = vmatprep.subr.bf16.mxu0 %v1483
    %1547 = vmatpush1.bf16.msra.mxu0 %v1482
    %1548 = vmatprep.subr.bf16.mxu0 %v1485
    %1549 = vmatpush1.bf16.msra.mxu0 %v1484
    %1550 = vmatprep.subr.bf16.mxu0 %v1487
    %1551 = vmatpush1.bf16.msra.mxu0 %v1486
    %1552 = vmatprep.subr.bf16.mxu0 %v1489
    %1553 = vmatpush1.bf16.msra.mxu0 %v1488
    %1554 = vmatprep.subr.bf16.mxu0 %v1491
    %1555 = vmatpush1.bf16.msra.mxu0 %v1490
    %1556 = vmatprep.subr.bf16.mxu0 %v1493
    %1557 = vmatpush1.bf16.msra.mxu0 %v1492
    %1558 = vmatprep.subr.bf16.mxu0 %v1495
    %1559 = vmatpush1.bf16.msra.mxu0 %v1494
    %1560 = vmatprep.subr.bf16.mxu0 %v1497
    %1561 = vmatpush1.bf16.msra.mxu0 %v1496
    %1562 = vmatprep.subr.bf16.mxu0 %v1499
    %1563 = vmatpush1.bf16.msra.mxu0 %v1498
    %1564 = vmatprep.subr.bf16.mxu0 %v1501
    %1565 = vmatpush1.bf16.msra.mxu0 %v1500
    %1566 = vmatprep.subr.bf16.mxu0 %v1503
    %1567 = vmatpush1.bf16.msra.mxu0 %v1502
    %1568 = vmatprep.subr.bf16.mxu0 %v1505
    %1569 = vmatpush1.bf16.msra.mxu0 %v1504
    %1570 = vmatprep.subr.bf16.mxu0 %v1507
    %1571 = vmatpush1.bf16.msra.mxu0 %v1506
    %1572 = vmatprep.subr.bf16.mxu0 %v1509
    %1573 = vmatpush1.bf16.msra.mxu0 %v1508
    %1574 = vmatprep.subr.bf16.mxu0 %v1511
    %1575 = vmatpush1.bf16.msra.mxu0 %v1510
    %1576 = vmatprep.mubr.bf16.mxu0 %v1339
    %1577 = vmatmul.mubr.bf16.gmra.mrb[0].mxu0 %v1338
    %v1578 = vpop.f32.mrb[0].mxu0
    %v1579 = vadd.f32 %v1377, %v1578
    %v1580 = vpop.f32.mrb[0].mxu0
    %v1581 = vadd.f32 %v1381, %v1580
    %v1582 = vpop.f32.mrb[0].mxu0
    %v1583 = vpop.f32.mrb[0].mxu0
    %1584 = vdwg.mxu0
    %v1585 = vld [vmem:[%s11] sm:$0x3]
    %v1586 = vld [vmem:[%s12] sm:$0x3]
    %v1587 = vmax.f32 %v1579, 0.0
    %v1588 = vmax.f32 %v1581, 0.0
    %v1589 = vadd.f32 %v1587, %v1588
    %1590 = vadd.xlane.f32.xlu0 %v1589
    %v1591 = vpop.xlane.xlu0 %1590
    %v1592 = vmul.f32 %v1587, %v1587
    %v1593 = vmul.f32 %v1588, %v1588
    %v1594 = vadd.f32 %v1592, %v1593
    %1595 = vadd.xlane.f32.xlu0 %v1594
    %v1596 = vpop.xlane.xlu0 %1595
    %v1597 = vmul.f32 %v1591, 0.00390625
    %v1598 = vmul.f32 %v1596, 0.00390625
    %v1599 = vmul.f32 %v1597, %v1597
    %v1600 = vsub.f32 %v1598, %v1599
    %v1601 = vsub.f32 %v1587, %v1597
    %v1602 = vsub.f32 %v1588, %v1597
    %v1603 = vadd.f32 %v1600, 1e-05
    %v1604 = vrsqrt.pop %v1603
    %v1605 = vmul.f32 %v1601, %v1604
    %v1606 = vmul.f32 %v1602, %v1604
    %v1608 = vlaneseq
    %v1609 = vshrl.u32 %v1608, 7
    %v1610 = vsub.s32 0, %v1609
    %v1611 = vrot.slane %v1585, %v1610
    %v1612 = vlaneseq
    %v1613 = vshrl.u32 %v1612, 7
    %v1614 = vsub.s32 1, %v1613
    %v1615 = vrot.slane %v1585, %v1614
    %v1618 = vmul.f32 %v1605, %v1611
    %v1619 = vmul.f32 %v1606, %v1615
    %v1621 = vlaneseq
    %v1622 = vshrl.u32 %v1621, 7
    %v1623 = vsub.s32 0, %v1622
    %v1624 = vrot.slane %v1586, %v1623
    %v1625 = vlaneseq
    %v1626 = vshrl.u32 %v1625, 7
    %v1627 = vsub.s32 1, %v1626
    %v1628 = vrot.slane %v1586, %v1627
    %v1631 = vadd.f32 %v1618, %v1624
    %v1632 = vadd.f32 %v1619, %v1628
    %v1633 = vpack.c.bf16 %v1631, %v1631
    %v1634 = vpack.c.bf16 %v1632, %v1632
    %v1635 = vld [vmem:[#allocation10] sm:$0xf]
    %v1636 = vld [vmem:[#allocation10 + $0x4] sm:$0xf]
    %v1637 = vld [vmem:[#allocation10 + $0x8] sm:$0xf]
    %v1638 = vld [vmem:[#allocation10 + $0xc] sm:$0xf]
    %v1639 = vld [vmem:[#allocation10 + $0x10] sm:$0xf]
    %v1640 = vld [vmem:[#allocation10 + $0x14] sm:$0xf]
    %v1641 = vld [vmem:[#allocation10 + $0x18] sm:$0xf]
    %v1642 = vld [vmem:[#allocation10 + $0x1c] sm:$0xf]
    %v1643 = vld [vmem:[#allocation10 + $0x20] sm:$0xf]
    %v1644 = vld [vmem:[#allocation10 + $0x24] sm:$0xf]
    %v1645 = vld [vmem:[#allocation10 + $0x28] sm:$0xf]
    %v1646 = vld [vmem:[#allocation10 + $0x2c] sm:$0xf]
    %v1647 = vld [vmem:[#allocation10 + $0x30] sm:$0xf]
    %v1648 = vld [vmem:[#allocation10 + $0x34] sm:$0xf]
    %v1649 = vld [vmem:[#allocation10 + $0x38] sm:$0xf]
    %v1650 = vld [vmem:[#allocation10 + $0x3c] sm:$0xf]
    %v1651 = vld [vmem:[#allocation10 + $0x40] sm:$0xf]
    %v1652 = vld [vmem:[#allocation10 + $0x44] sm:$0xf]
    %v1653 = vld [vmem:[#allocation10 + $0x48] sm:$0xf]
    %v1654 = vld [vmem:[#allocation10 + $0x4c] sm:$0xf]
    %v1655 = vld [vmem:[#allocation10 + $0x50] sm:$0xf]
    %v1656 = vld [vmem:[#allocation10 + $0x54] sm:$0xf]
    %v1657 = vld [vmem:[#allocation10 + $0x58] sm:$0xf]
    %v1658 = vld [vmem:[#allocation10 + $0x5c] sm:$0xf]
    %v1659 = vld [vmem:[#allocation10 + $0x60] sm:$0xf]
    %v1660 = vld [vmem:[#allocation10 + $0x64] sm:$0xf]
    %v1661 = vld [vmem:[#allocation10 + $0x68] sm:$0xf]
    %v1662 = vld [vmem:[#allocation10 + $0x6c] sm:$0xf]
    %v1663 = vld [vmem:[#allocation10 + $0x70] sm:$0xf]
    %v1664 = vld [vmem:[#allocation10 + $0x74] sm:$0xf]
    %v1665 = vld [vmem:[#allocation10 + $0x78] sm:$0xf]
    %v1666 = vld [vmem:[#allocation10 + $0x7c] sm:$0xf]
    %v1667 = vld [vmem:[%s14] sm:$0x1]
    %v1669 = vlaneseq
    %v1670 = vshrl.u32 %v1669, 7
    %v1671 = vsub.s32 0, %v1670
    %v1672 = vrot.slane %v1667, %v1671
    %v1706 = vunpack.c.l.b16 %v1635
    %v1707 = vunpack.c.l.b16 %v1636
    %v1708 = vunpack.c.l.b16 %v1637
    %v1709 = vunpack.c.l.b16 %v1638
    %v1710 = vunpack.c.l.b16 %v1639
    %v1711 = vunpack.c.l.b16 %v1640
    %v1712 = vunpack.c.l.b16 %v1641
    %v1713 = vunpack.c.l.b16 %v1642
    %v1714 = vunpack.c.l.b16 %v1643
    %v1715 = vunpack.c.l.b16 %v1644
    %v1716 = vunpack.c.l.b16 %v1645
    %v1717 = vunpack.c.l.b16 %v1646
    %v1718 = vunpack.c.l.b16 %v1647
    %v1719 = vunpack.c.l.b16 %v1648
    %v1720 = vunpack.c.l.b16 %v1649
    %v1721 = vunpack.c.l.b16 %v1650
    %v1722 = vunpack.c.l.b16 %v1651
    %v1723 = vunpack.c.l.b16 %v1652
    %v1724 = vunpack.c.l.b16 %v1653
    %v1725 = vunpack.c.l.b16 %v1654
    %v1726 = vunpack.c.l.b16 %v1655
    %v1727 = vunpack.c.l.b16 %v1656
    %v1728 = vunpack.c.l.b16 %v1657
    %v1729 = vunpack.c.l.b16 %v1658
    %v1730 = vunpack.c.l.b16 %v1659
    %v1731 = vunpack.c.l.b16 %v1660
    %v1732 = vunpack.c.l.b16 %v1661
    %v1733 = vunpack.c.l.b16 %v1662
    %v1734 = vunpack.c.l.b16 %v1663
    %v1735 = vunpack.c.l.b16 %v1664
    %v1736 = vunpack.c.l.b16 %v1665
    %v1737 = vunpack.c.l.b16 %v1666
    %v1738 = vpack.c.b16 %v1707, %v1706
    %v1739 = vpack.c.b16 %v1709, %v1708
    %v1740 = vpack.c.b16 %v1711, %v1710
    %v1741 = vpack.c.b16 %v1713, %v1712
    %v1742 = vpack.c.b16 %v1715, %v1714
    %v1743 = vpack.c.b16 %v1717, %v1716
    %v1744 = vpack.c.b16 %v1719, %v1718
    %v1745 = vpack.c.b16 %v1721, %v1720
    %v1746 = vpack.c.b16 %v1723, %v1722
    %v1747 = vpack.c.b16 %v1725, %v1724
    %v1748 = vpack.c.b16 %v1727, %v1726
    %v1749 = vpack.c.b16 %v1729, %v1728
    %v1750 = vpack.c.b16 %v1731, %v1730
    %v1751 = vpack.c.b16 %v1733, %v1732
    %v1752 = vpack.c.b16 %v1735, %v1734
    %v1753 = vpack.c.b16 %v1737, %v1736
    %1770 = vmatprep.subr.bf16.mxu0 0
    %1771 = vmatpush1.bf16.msra.mxu0 %v1738
    %1772 = vmatprep.subr.bf16.mxu0 0
    %1773 = vmatpush1.bf16.msra.mxu0 %v1739
    %1774 = vmatprep.subr.bf16.mxu0 0
    %1775 = vmatpush1.bf16.msra.mxu0 %v1740
    %1776 = vmatprep.subr.bf16.mxu0 0
    %1777 = vmatpush1.bf16.msra.mxu0 %v1741
    %1778 = vmatprep.subr.bf16.mxu0 0
    %1779 = vmatpush1.bf16.msra.mxu0 %v1742
    %1780 = vmatprep.subr.bf16.mxu0 0
    %1781 = vmatpush1.bf16.msra.mxu0 %v1743
    %1782 = vmatprep.subr.bf16.mxu0 0
    %1783 = vmatpush1.bf16.msra.mxu0 %v1744
    %1784 = vmatprep.subr.bf16.mxu0 0
    %1785 = vmatpush1.bf16.msra.mxu0 %v1745
    %1786 = vmatprep.subr.bf16.mxu0 0
    %1787 = vmatpush1.bf16.msra.mxu0 %v1746
    %1788 = vmatprep.subr.bf16.mxu0 0
    %1789 = vmatpush1.bf16.msra.mxu0 %v1747
    %1790 = vmatprep.subr.bf16.mxu0 0
    %1791 = vmatpush1.bf16.msra.mxu0 %v1748
    %1792 = vmatprep.subr.bf16.mxu0 0
    %1793 = vmatpush1.bf16.msra.mxu0 %v1749
    %1794 = vmatprep.subr.bf16.mxu0 0
    %1795 = vmatpush1.bf16.msra.mxu0 %v1750
    %1796 = vmatprep.subr.bf16.mxu0 0
    %1797 = vmatpush1.bf16.msra.mxu0 %v1751
    %1798 = vmatprep.subr.bf16.mxu0 0
    %1799 = vmatpush1.bf16.msra.mxu0 %v1752
    %1800 = vmatprep.subr.bf16.mxu0 0
    %1801 = vmatpush1.bf16.msra.mxu0 %v1753
    %1802 = vmatprep.mubr.bf16.mxu0 %v1634
    %1803 = vmatmul.mubr.bf16.gmra.mrb[0].mxu0 %v1633
    %v1804 = vpop.f32.mrb[0].mxu0
    %v1805 = vadd.f32 %v1672, %v1804
    %v1806 = vpop.f32.mrb[0].mxu0
    %v1807 = vpop.f32.mrb[0].mxu0
    %v1808 = vpop.f32.mrb[0].mxu0
    %1809 = vdwg.mxu0
    %1810 = vst [vmem:[#allocation11] sm:$0xff] %v1805
    // Predicated region
    $region82: #{tpu_custom_call.1} parent=1 // pred_check
      _
    $region83: #{tpu_custom_call.1} parent=1 // pred_check_branch
      %1812 = sbr.rel (0) target = $region85
    $region84: #{tpu_custom_call.1} parent=1 // pred_region
      %s1814 = ssub.s32 128, 128
      %1815 = vsyncadd [#allocation4], %s1814
      %s1817 = sshll.u32 [#allocation11], 4
      %s1818 = int_to_ptr.vmem [resolvable:$true] %s1817
      %1820 = dma.vmem_to_hbm [thread:$0]  %s1818, 128, %s15, [#allocation4]
    $region85: #{tpu_custom_call.1} parent=1 // pred_fallthru
      _
    // Predicated region
    $region86: #{tpu_custom_call.1} parent=1 // pred_check
      _
    $region87: #{tpu_custom_call.1} parent=1 // pred_check_branch
      %1822 = sbr.rel (0) target = $region89
    $region88: #{tpu_custom_call.1} parent=1 // pred_region
      %1823 = dma.done [#allocation4], 128
    $region89: #{tpu_custom_call.1} parent=1 // pred_fallthru
      _
    %1824 = vsyncpa [#allocation3], 1
    %1825 = vsyncpa [#allocation6], 1
    %1826 = vsyncpa [#allocation9], 1
    %1827 = vsyncpa [#allocation4], 1

</llo_original>
